<compile_context>
chip_gen: v7x
topology: tpu7x:2x2x1
jax: 0.10.0
libtpu: 0.0.40
codegen_flags: <defaults>
</compile_context>

<pallas_src>
import functools

import numpy as np
import jax
import jax.numpy as jnp
from jax.experimental import pallas as pl
from jax.experimental.pallas import tpu as pltpu


def _upsample_matrix_x2(s: int) -> np.ndarray:
    """(2s, s) matrix for 1-D linear upsample by 2 with PyTorch F.interpolate
    (mode='linear'/'trilinear', align_corners=False) semantics."""
    m = np.zeros((2 * s, s), dtype=np.float32)
    for i in range(2 * s):
        src = (i + 0.5) * 0.5 - 0.5
        src = max(src, 0.0)
        i0 = min(int(np.floor(src)), s - 1)
        frac = src - i0
        i1 = min(i0 + 1, s - 1)
        m[i, i0] += 1.0 - frac
        m[i, i1] += frac
    return m


def _upblock_kernel(x_ref, w_ref, b_ref, m_ref, o_ref, *, C, W, conv_first):
    # x_ref: (BN, C*W, HD)        VMEM   input block (free row-major view of NCWHD)
    # w_ref: (O*C,)               SMEM   conv weight, row-major (O, C)
    # b_ref: (O,)                 SMEM   conv bias
    # m_ref: (HD, HD2)            VMEM   kron(Mh, Md)^T trilinear factor, HD2 = 4*HD
    # o_ref: (BN, TO, W, 2*HD2)   VMEM   output: last dim = [even rows | odd rows]
    BN = x_ref.shape[0]
    HD = x_ref.shape[2]
    HD2 = m_ref.shape[1]
    TO = o_ref.shape[1]
    o_base = pl.program_id(1) * TO

    m = m_ref[...]

    def conv_rows(src):
        # src: (BN, C, W, L) -> list of TO arrays (BN, W, L); SMEM scalar x vector,
        # seeded with the c=0 term (no zeros init, no per-iteration re-broadcasts).
        rows = []
        for o in range(TO):
            acc = w_ref[(o_base + o) * C] * src[:, 0]
            for c in range(1, C):
                acc = acc + w_ref[(o_base + o) * C + c] * src[:, c]
            rows.append(acc + b_ref[o_base + o])   # bias commutes through both lerps
        return rows

    if conv_first:
        # O <= C: 1x1x1 conv first (fewer rows through the kron matmul).
        x4 = x_ref[...].reshape(BN, C, W, HD)                      # free major split
        y = jnp.stack(conv_rows(x4), axis=1)                       # (BN, TO, W, HD)
        up = jnp.dot(y.reshape(BN * TO * W, HD), m,
                     preferred_element_type=jnp.float32,
                     precision=jax.lax.Precision.HIGHEST)          # (BN*TO*W, HD2)
        t = up.reshape(BN, TO, W, HD2)
    else:
        # C < O (example): fused (H, D) upsample on the C input channels first.
        up = jnp.dot(x_ref[...].reshape(BN * C * W, HD), m,
                     preferred_element_type=jnp.float32,
                     precision=jax.lax.Precision.HIGHEST)          # (BN*C*W, HD2)
        up4 = up.reshape(BN, C, W, HD2)                            # free major split
        t = jnp.stack(conv_rows(up4), axis=1)                      # (BN, TO, W, HD2)

    # ---- W upsample: 2-tap edge-clamped lerp, vectorized over the whole block. ----
    if W > 1:
        prv = jnp.concatenate([t[:, :, :1, :], t[:, :, :-1, :]], axis=2)
        nxt = jnp.concatenate([t[:, :, 1:, :], t[:, :, -1:, :]], axis=2)
    else:
        prv = t
        nxt = t
    # Two whole-slab, lane-tile-aligned stores (HD2 is a multiple of 128 here).
    o_ref[:, :, :, 0:HD2] = 0.75 * t + 0.25 * prv          # output rows 2w
    o_ref[:, :, :, HD2:2 * HD2] = 0.75 * t + 0.25 * nxt    # output rows 2w+1


def upblock_forward(x, weight, bias, *, bn=None, to=None):
    """x: (N, C, W, H, D) f32; weight: (O, C) (= Conv3d k=1 weight squeezed);
    bias: (O,).  Returns (N, O, 2W, 2H, 2D), matching UpBlock.forward."""
    N, C, W, H, D = x.shape
    O = weight.shape[0]
    HD = H * D
    HD2 = 4 * HD

    # Batch-block to amortize per-grid-step overhead, but keep >= 2 grid cells
    # (two v7x TensorCores) whenever possible.
    if bn is None:
        bn = 1
        for cand in (8, 4, 2):
            if N % cand == 0 and N // cand >= 2:
                bn = cand
                break
    assert N % bn == 0, "batch block must divide N"
    if to is None:
        to = O
        if N // bn < 2:
            for cand in (2, 4, 8):
                if O % cand == 0:
                    to = O // cand
                    break
    assert O % to == 0, "output-channel tile must divide O"

    conv_first = O <= C   # run the kron matmul on min(C, O) channels

    # Shared kron(Mh, Md)^T trilinear factor for the fused (H, D) axes.
    # (For large H*D switch to the separable two-matmul form; HD=64 here.)
    Mh = _upsample_matrix_x2(H)
    Md = _upsample_matrix_x2(D)
    mhd_t = jnp.asarray(np.kron(Mh, Md).T)                 # (HD, HD2)

    x_r = x.reshape(N, C * W, HD).astype(jnp.float32)      # free reshape, no transpose
    w_flat = weight.reshape(O * C).astype(jnp.float32)     # SMEM scalar table
    b_flat = bias.reshape(O).astype(jnp.float32)           # SMEM scalar table

    kernel = functools.partial(_upblock_kernel, C=C, W=W, conv_first=conv_first)

    out = pl.pallas_call(
        kernel,
        out_shape=jax.ShapeDtypeStruct((N, O, W, 2 * HD2), jnp.float32),
        grid=(N // bn, O // to),
        in_specs=[
            pl.BlockSpec((bn, C * W, HD), lambda n, j: (n, 0, 0)),
            pl.BlockSpec(memory_space=pltpu.MemorySpace.SMEM),
            pl.BlockSpec(memory_space=pltpu.MemorySpace.SMEM),
            pl.BlockSpec((HD, HD2), lambda n, j: (0, 0)),
        ],
        out_specs=pl.BlockSpec((bn, to, W, 2 * HD2), lambda n, j: (n, j, 0, 0)),
        compiler_params=pltpu.CompilerParams(
            dimension_semantics=("parallel", "parallel")),
    )(x_r, w_flat, b_flat, mhd_t)

    # (N, O, W, [even|odd] x (2H*2D)) -> (N, O, 2W, 2H, 2D): pure row-major reshape.
    return out.reshape(N, O, 2 * W, 2 * H, 2 * D)


if __name__ == "__main__":
    key = jax.random.PRNGKey(0)
    kx, kw, kb = jax.random.split(key, 3)

    N, C_in, C_out = 2, 4, 8
    W = H = D = 8

    x = jax.random.normal(kx, (N, C_in, W, H, D), dtype=jnp.float32)
    # Deterministic Conv3d(kernel_size=1, bias=True) parameters (synthetic init).
    bound = 1.0 / float(np.sqrt(C_in))
    weight = jax.random.uniform(kw, (C_out, C_in), jnp.float32, -bound, bound)
    bias = jax.random.uniform(kb, (C_out,), jnp.float32, -bound, bound)

    out = jax.block_until_ready(upblock_forward(x, weight, bias))
    assert out.shape == (N, C_out, 2 * W, 2 * H, 2 * D), out.shape

    # Pure-JAX reference with PyTorch trilinear (align_corners=False) semantics:
    # upsample first, then conv (the kernel reorders; they are mathematically equal).
    Mw = jnp.asarray(_upsample_matrix_x2(W))
    Mh = jnp.asarray(_upsample_matrix_x2(H))
    Md = jnp.asarray(_upsample_matrix_x2(D))
    up_ref = jnp.einsum('Ww,Hh,Dd,ncwhd->ncWHD', Mw, Mh, Md, x,
                        precision=jax.lax.Precision.HIGHEST)
    ref = jnp.einsum('oc,ncWHD->noWHD', weight, up_ref,
                     precision=jax.lax.Precision.HIGHEST) \
        + bias[None, :, None, None, None]

    if not bool(jnp.allclose(out, ref, atol=2e-3, rtol=2e-3)):
        max_err = float(jnp.max(jnp.abs(out - ref)))
        raise SystemExit(f"mismatch: max abs err = {max_err}")
    print("KERNEL_OK")
</pallas_src>

<mosaic_0001>
module attributes {stable_mosaic.version = 11 : i64} {
  func.func @_upblock_kernel(%arg0: i32, %arg1: i32, %arg2: memref<1x32x64xf32, #tpu.memory_space<vmem>>, %arg3: memref<32xf32, #tpu.memory_space<smem>>, %arg4: memref<8xf32, #tpu.memory_space<smem>>, %arg5: memref<64x256xf32, #tpu.memory_space<vmem>>, %arg6: memref<1x8x8x512xf32, #tpu.memory_space<vmem>>) attributes {dimension_semantics = [#tpu.dimension_semantics<parallel>, #tpu.dimension_semantics<parallel>], iteration_bounds = array<i64: 2, 1>, scalar_prefetch = 0 : i64, scratch_operands = 0 : i64, tpu.core_type = #tpu.core_type<tc>, window_params = [{transform_indices = @transform_0, window_bounds = array<i64: 1, 32, 64>}, {transform_indices = @transform_1, window_bounds = array<i64: 32>}, {transform_indices = @transform_2, window_bounds = array<i64: 8>}, {pipeline_mode = #tpu.pipeline_mode<synchronous>, transform_indices = @transform_3, window_bounds = array<i64: 64, 256>}, {transform_indices = @transform_4, window_bounds = array<i64: 1, 8, 8, 512>}]} {
    %c8_i32 = arith.constant 8 : i32
    %0 = arith.muli %arg1, %c8_i32 : i32
    %c0 = arith.constant 0 : index
    %c0_0 = arith.constant 0 : index
    %1 = vector.load %arg5[%c0, %c0_0] : memref<64x256xf32, #tpu.memory_space<vmem>>, vector<64x256xf32>
    %c0_1 = arith.constant 0 : index
    %c0_2 = arith.constant 0 : index
    %c0_3 = arith.constant 0 : index
    %2 = vector.load %arg2[%c0_1, %c0_2, %c0_3] : memref<1x32x64xf32, #tpu.memory_space<vmem>>, vector<1x32x64xf32>
    %3 = vector.shape_cast %2 : vector<1x32x64xf32> to vector<32x64xf32>
    %cst = arith.constant dense<0.000000e+00> : vector<32x256xf32>
    %4 = tpu.matmul %3, %1, %cst {dimension_numbers = #tpu.dot_dimension_numbers<[1], [0], [0], [1], [0, 0, 1, 1], [], []>, precision = #tpu.contract_precision<fp32>} : vector<32x64xf32>, vector<64x256xf32>, vector<32x256xf32> -> vector<32x256xf32>
    %5 = vector.shape_cast %4 : vector<32x256xf32> to vector<1x4x8x256xf32>
    %c0_i32 = arith.constant 0 : i32
    %6 = arith.addi %0, %c0_i32 : i32
    %c4_i32 = arith.constant 4 : i32
    %7 = arith.muli %6, %c4_i32 : i32
    %8 = arith.index_cast %7 : i32 to index
    %9 = memref.load %arg3[%8] : memref<32xf32, #tpu.memory_space<smem>>
    %10 = vector.extract_strided_slice %5 {offsets = [0, 0, 0, 0], sizes = [1, 1, 8, 256], strides = [1, 1, 1, 1]} : vector<1x4x8x256xf32> to vector<1x1x8x256xf32>
    %11 = vector.shape_cast %10 : vector<1x1x8x256xf32> to vector<1x8x256xf32>
    %12 = vector.broadcast %9 : f32 to vector<1x8x256xf32>
    %13 = arith.mulf %12, %11 : vector<1x8x256xf32>
    %c0_i32_4 = arith.constant 0 : i32
    %14 = arith.addi %0, %c0_i32_4 : i32
    %c4_i32_5 = arith.constant 4 : i32
    %15 = arith.muli %14, %c4_i32_5 : i32
    %c1_i32 = arith.constant 1 : i32
    %16 = arith.addi %15, %c1_i32 : i32
    %17 = arith.index_cast %16 : i32 to index
    %18 = memref.load %arg3[%17] : memref<32xf32, #tpu.memory_space<smem>>
    %19 = vector.extract_strided_slice %5 {offsets = [0, 1, 0, 0], sizes = [1, 1, 8, 256], strides = [1, 1, 1, 1]} : vector<1x4x8x256xf32> to vector<1x1x8x256xf32>
    %20 = vector.shape_cast %19 : vector<1x1x8x256xf32> to vector<1x8x256xf32>
    %21 = vector.broadcast %18 : f32 to vector<1x8x256xf32>
    %22 = arith.mulf %21, %20 : vector<1x8x256xf32>
    %23 = arith.addf %13, %22 : vector<1x8x256xf32>
    %c0_i32_6 = arith.constant 0 : i32
    %24 = arith.addi %0, %c0_i32_6 : i32
    %c4_i32_7 = arith.constant 4 : i32
    %25 = arith.muli %24, %c4_i32_7 : i32
    %c2_i32 = arith.constant 2 : i32
    %26 = arith.addi %25, %c2_i32 : i32
    %27 = arith.index_cast %26 : i32 to index
    %28 = memref.load %arg3[%27] : memref<32xf32, #tpu.memory_space<smem>>
    %29 = vector.extract_strided_slice %5 {offsets = [0, 2, 0, 0], sizes = [1, 1, 8, 256], strides = [1, 1, 1, 1]} : vector<1x4x8x256xf32> to vector<1x1x8x256xf32>
    %30 = vector.shape_cast %29 : vector<1x1x8x256xf32> to vector<1x8x256xf32>
    %31 = vector.broadcast %28 : f32 to vector<1x8x256xf32>
    %32 = arith.mulf %31, %30 : vector<1x8x256xf32>
    %33 = arith.addf %23, %32 : vector<1x8x256xf32>
    %c0_i32_8 = arith.constant 0 : i32
    %34 = arith.addi %0, %c0_i32_8 : i32
    %c4_i32_9 = arith.constant 4 : i32
    %35 = arith.muli %34, %c4_i32_9 : i32
    %c3_i32 = arith.constant 3 : i32
    %36 = arith.addi %35, %c3_i32 : i32
    %37 = arith.index_cast %36 : i32 to index
    %38 = memref.load %arg3[%37] : memref<32xf32, #tpu.memory_space<smem>>
    %39 = vector.extract_strided_slice %5 {offsets = [0, 3, 0, 0], sizes = [1, 1, 8, 256], strides = [1, 1, 1, 1]} : vector<1x4x8x256xf32> to vector<1x1x8x256xf32>
    %40 = vector.shape_cast %39 : vector<1x1x8x256xf32> to vector<1x8x256xf32>
    %41 = vector.broadcast %38 : f32 to vector<1x8x256xf32>
    %42 = arith.mulf %41, %40 : vector<1x8x256xf32>
    %43 = arith.addf %33, %42 : vector<1x8x256xf32>
    %c0_i32_10 = arith.constant 0 : i32
    %44 = arith.addi %0, %c0_i32_10 : i32
    %45 = arith.index_cast %44 : i32 to index
    %46 = memref.load %arg4[%45] : memref<8xf32, #tpu.memory_space<smem>>
    %47 = vector.broadcast %46 : f32 to vector<1x8x256xf32>
    %48 = arith.addf %43, %47 : vector<1x8x256xf32>
    %c1_i32_11 = arith.constant 1 : i32
    %49 = arith.addi %0, %c1_i32_11 : i32
    %c4_i32_12 = arith.constant 4 : i32
    %50 = arith.muli %49, %c4_i32_12 : i32
    %51 = arith.index_cast %50 : i32 to index
    %52 = memref.load %arg3[%51] : memref<32xf32, #tpu.memory_space<smem>>
    %53 = vector.extract_strided_slice %5 {offsets = [0, 0, 0, 0], sizes = [1, 1, 8, 256], strides = [1, 1, 1, 1]} : vector<1x4x8x256xf32> to vector<1x1x8x256xf32>
    %54 = vector.shape_cast %53 : vector<1x1x8x256xf32> to vector<1x8x256xf32>
    %55 = vector.broadcast %52 : f32 to vector<1x8x256xf32>
    %56 = arith.mulf %55, %54 : vector<1x8x256xf32>
    %c1_i32_13 = arith.constant 1 : i32
    %57 = arith.addi %0, %c1_i32_13 : i32
    %c4_i32_14 = arith.constant 4 : i32
    %58 = arith.muli %57, %c4_i32_14 : i32
    %c1_i32_15 = arith.constant 1 : i32
    %59 = arith.addi %58, %c1_i32_15 : i32
    %60 = arith.index_cast %59 : i32 to index
    %61 = memref.load %arg3[%60] : memref<32xf32, #tpu.memory_space<smem>>
    %62 = vector.extract_strided_slice %5 {offsets = [0, 1, 0, 0], sizes = [1, 1, 8, 256], strides = [1, 1, 1, 1]} : vector<1x4x8x256xf32> to vector<1x1x8x256xf32>
    %63 = vector.shape_cast %62 : vector<1x1x8x256xf32> to vector<1x8x256xf32>
    %64 = vector.broadcast %61 : f32 to vector<1x8x256xf32>
    %65 = arith.mulf %64, %63 : vector<1x8x256xf32>
    %66 = arith.addf %56, %65 : vector<1x8x256xf32>
    %c1_i32_16 = arith.constant 1 : i32
    %67 = arith.addi %0, %c1_i32_16 : i32
    %c4_i32_17 = arith.constant 4 : i32
    %68 = arith.muli %67, %c4_i32_17 : i32
    %c2_i32_18 = arith.constant 2 : i32
    %69 = arith.addi %68, %c2_i32_18 : i32
    %70 = arith.index_cast %69 : i32 to index
    %71 = memref.load %arg3[%70] : memref<32xf32, #tpu.memory_space<smem>>
    %72 = vector.extract_strided_slice %5 {offsets = [0, 2, 0, 0], sizes = [1, 1, 8, 256], strides = [1, 1, 1, 1]} : vector<1x4x8x256xf32> to vector<1x1x8x256xf32>
    %73 = vector.shape_cast %72 : vector<1x1x8x256xf32> to vector<1x8x256xf32>
    %74 = vector.broadcast %71 : f32 to vector<1x8x256xf32>
    %75 = arith.mulf %74, %73 : vector<1x8x256xf32>
    %76 = arith.addf %66, %75 : vector<1x8x256xf32>
    %c1_i32_19 = arith.constant 1 : i32
    %77 = arith.addi %0, %c1_i32_19 : i32
    %c4_i32_20 = arith.constant 4 : i32
    %78 = arith.muli %77, %c4_i32_20 : i32
    %c3_i32_21 = arith.constant 3 : i32
    %79 = arith.addi %78, %c3_i32_21 : i32
    %80 = arith.index_cast %79 : i32 to index
    %81 = memref.load %arg3[%80] : memref<32xf32, #tpu.memory_space<smem>>
    %82 = vector.extract_strided_slice %5 {offsets = [0, 3, 0, 0], sizes = [1, 1, 8, 256], strides = [1, 1, 1, 1]} : vector<1x4x8x256xf32> to vector<1x1x8x256xf32>
    %83 = vector.shape_cast %82 : vector<1x1x8x256xf32> to vector<1x8x256xf32>
    %84 = vector.broadcast %81 : f32 to vector<1x8x256xf32>
    %85 = arith.mulf %84, %83 : vector<1x8x256xf32>
    %86 = arith.addf %76, %85 : vector<1x8x256xf32>
    %c1_i32_22 = arith.constant 1 : i32
    %87 = arith.addi %0, %c1_i32_22 : i32
    %88 = arith.index_cast %87 : i32 to index
    %89 = memref.load %arg4[%88] : memref<8xf32, #tpu.memory_space<smem>>
    %90 = vector.broadcast %89 : f32 to vector<1x8x256xf32>
    %91 = arith.addf %86, %90 : vector<1x8x256xf32>
    %c2_i32_23 = arith.constant 2 : i32
    %92 = arith.addi %0, %c2_i32_23 : i32
    %c4_i32_24 = arith.constant 4 : i32
    %93 = arith.muli %92, %c4_i32_24 : i32
    %94 = arith.index_cast %93 : i32 to index
    %95 = memref.load %arg3[%94] : memref<32xf32, #tpu.memory_space<smem>>
    %96 = vector.extract_strided_slice %5 {offsets = [0, 0, 0, 0], sizes = [1, 1, 8, 256], strides = [1, 1, 1, 1]} : vector<1x4x8x256xf32> to vector<1x1x8x256xf32>
    %97 = vector.shape_cast %96 : vector<1x1x8x256xf32> to vector<1x8x256xf32>
    %98 = vector.broadcast %95 : f32 to vector<1x8x256xf32>
    %99 = arith.mulf %98, %97 : vector<1x8x256xf32>
    %c2_i32_25 = arith.constant 2 : i32
    %100 = arith.addi %0, %c2_i32_25 : i32
    %c4_i32_26 = arith.constant 4 : i32
    %101 = arith.muli %100, %c4_i32_26 : i32
    %c1_i32_27 = arith.constant 1 : i32
    %102 = arith.addi %101, %c1_i32_27 : i32
    %103 = arith.index_cast %102 : i32 to index
    %104 = memref.load %arg3[%103] : memref<32xf32, #tpu.memory_space<smem>>
    %105 = vector.extract_strided_slice %5 {offsets = [0, 1, 0, 0], sizes = [1, 1, 8, 256], strides = [1, 1, 1, 1]} : vector<1x4x8x256xf32> to vector<1x1x8x256xf32>
    %106 = vector.shape_cast %105 : vector<1x1x8x256xf32> to vector<1x8x256xf32>
    %107 = vector.broadcast %104 : f32 to vector<1x8x256xf32>
    %108 = arith.mulf %107, %106 : vector<1x8x256xf32>
    %109 = arith.addf %99, %108 : vector<1x8x256xf32>
    %c2_i32_28 = arith.constant 2 : i32
    %110 = arith.addi %0, %c2_i32_28 : i32
    %c4_i32_29 = arith.constant 4 : i32
    %111 = arith.muli %110, %c4_i32_29 : i32
    %c2_i32_30 = arith.constant 2 : i32
    %112 = arith.addi %111, %c2_i32_30 : i32
    %113 = arith.index_cast %112 : i32 to index
    %114 = memref.load %arg3[%113] : memref<32xf32, #tpu.memory_space<smem>>
    %115 = vector.extract_strided_slice %5 {offsets = [0, 2, 0, 0], sizes = [1, 1, 8, 256], strides = [1, 1, 1, 1]} : vector<1x4x8x256xf32> to vector<1x1x8x256xf32>
    %116 = vector.shape_cast %115 : vector<1x1x8x256xf32> to vector<1x8x256xf32>
    %117 = vector.broadcast %114 : f32 to vector<1x8x256xf32>
    %118 = arith.mulf %117, %116 : vector<1x8x256xf32>
    %119 = arith.addf %109, %118 : vector<1x8x256xf32>
    %c2_i32_31 = arith.constant 2 : i32
    %120 = arith.addi %0, %c2_i32_31 : i32
    %c4_i32_32 = arith.constant 4 : i32
    %121 = arith.muli %120, %c4_i32_32 : i32
    %c3_i32_33 = arith.constant 3 : i32
    %122 = arith.addi %121, %c3_i32_33 : i32
    %123 = arith.index_cast %122 : i32 to index
    %124 = memref.load %arg3[%123] : memref<32xf32, #tpu.memory_space<smem>>
    %125 = vector.extract_strided_slice %5 {offsets = [0, 3, 0, 0], sizes = [1, 1, 8, 256], strides = [1, 1, 1, 1]} : vector<1x4x8x256xf32> to vector<1x1x8x256xf32>
    %126 = vector.shape_cast %125 : vector<1x1x8x256xf32> to vector<1x8x256xf32>
    %127 = vector.broadcast %124 : f32 to vector<1x8x256xf32>
    %128 = arith.mulf %127, %126 : vector<1x8x256xf32>
    %129 = arith.addf %119, %128 : vector<1x8x256xf32>
    %c2_i32_34 = arith.constant 2 : i32
    %130 = arith.addi %0, %c2_i32_34 : i32
    %131 = arith.index_cast %130 : i32 to index
    %132 = memref.load %arg4[%131] : memref<8xf32, #tpu.memory_space<smem>>
    %133 = vector.broadcast %132 : f32 to vector<1x8x256xf32>
    %134 = arith.addf %129, %133 : vector<1x8x256xf32>
    %c3_i32_35 = arith.constant 3 : i32
    %135 = arith.addi %0, %c3_i32_35 : i32
    %c4_i32_36 = arith.constant 4 : i32
    %136 = arith.muli %135, %c4_i32_36 : i32
    %137 = arith.index_cast %136 : i32 to index
    %138 = memref.load %arg3[%137] : memref<32xf32, #tpu.memory_space<smem>>
    %139 = vector.extract_strided_slice %5 {offsets = [0, 0, 0, 0], sizes = [1, 1, 8, 256], strides = [1, 1, 1, 1]} : vector<1x4x8x256xf32> to vector<1x1x8x256xf32>
    %140 = vector.shape_cast %139 : vector<1x1x8x256xf32> to vector<1x8x256xf32>
    %141 = vector.broadcast %138 : f32 to vector<1x8x256xf32>
    %142 = arith.mulf %141, %140 : vector<1x8x256xf32>
    %c3_i32_37 = arith.constant 3 : i32
    %143 = arith.addi %0, %c3_i32_37 : i32
    %c4_i32_38 = arith.constant 4 : i32
    %144 = arith.muli %143, %c4_i32_38 : i32
    %c1_i32_39 = arith.constant 1 : i32
    %145 = arith.addi %144, %c1_i32_39 : i32
    %146 = arith.index_cast %145 : i32 to index
    %147 = memref.load %arg3[%146] : memref<32xf32, #tpu.memory_space<smem>>
    %148 = vector.extract_strided_slice %5 {offsets = [0, 1, 0, 0], sizes = [1, 1, 8, 256], strides = [1, 1, 1, 1]} : vector<1x4x8x256xf32> to vector<1x1x8x256xf32>
    %149 = vector.shape_cast %148 : vector<1x1x8x256xf32> to vector<1x8x256xf32>
    %150 = vector.broadcast %147 : f32 to vector<1x8x256xf32>
    %151 = arith.mulf %150, %149 : vector<1x8x256xf32>
    %152 = arith.addf %142, %151 : vector<1x8x256xf32>
    %c3_i32_40 = arith.constant 3 : i32
    %153 = arith.addi %0, %c3_i32_40 : i32
    %c4_i32_41 = arith.constant 4 : i32
    %154 = arith.muli %153, %c4_i32_41 : i32
    %c2_i32_42 = arith.constant 2 : i32
    %155 = arith.addi %154, %c2_i32_42 : i32
    %156 = arith.index_cast %155 : i32 to index
    %157 = memref.load %arg3[%156] : memref<32xf32, #tpu.memory_space<smem>>
    %158 = vector.extract_strided_slice %5 {offsets = [0, 2, 0, 0], sizes = [1, 1, 8, 256], strides = [1, 1, 1, 1]} : vector<1x4x8x256xf32> to vector<1x1x8x256xf32>
    %159 = vector.shape_cast %158 : vector<1x1x8x256xf32> to vector<1x8x256xf32>
    %160 = vector.broadcast %157 : f32 to vector<1x8x256xf32>
    %161 = arith.mulf %160, %159 : vector<1x8x256xf32>
    %162 = arith.addf %152, %161 : vector<1x8x256xf32>
    %c3_i32_43 = arith.constant 3 : i32
    %163 = arith.addi %0, %c3_i32_43 : i32
    %c4_i32_44 = arith.constant 4 : i32
    %164 = arith.muli %163, %c4_i32_44 : i32
    %c3_i32_45 = arith.constant 3 : i32
    %165 = arith.addi %164, %c3_i32_45 : i32
    %166 = arith.index_cast %165 : i32 to index
    %167 = memref.load %arg3[%166] : memref<32xf32, #tpu.memory_space<smem>>
    %168 = vector.extract_strided_slice %5 {offsets = [0, 3, 0, 0], sizes = [1, 1, 8, 256], strides = [1, 1, 1, 1]} : vector<1x4x8x256xf32> to vector<1x1x8x256xf32>
    %169 = vector.shape_cast %168 : vector<1x1x8x256xf32> to vector<1x8x256xf32>
    %170 = vector.broadcast %167 : f32 to vector<1x8x256xf32>
    %171 = arith.mulf %170, %169 : vector<1x8x256xf32>
    %172 = arith.addf %162, %171 : vector<1x8x256xf32>
    %c3_i32_46 = arith.constant 3 : i32
    %173 = arith.addi %0, %c3_i32_46 : i32
    %174 = arith.index_cast %173 : i32 to index
    %175 = memref.load %arg4[%174] : memref<8xf32, #tpu.memory_space<smem>>
    %176 = vector.broadcast %175 : f32 to vector<1x8x256xf32>
    %177 = arith.addf %172, %176 : vector<1x8x256xf32>
    %c4_i32_47 = arith.constant 4 : i32
    %178 = arith.addi %0, %c4_i32_47 : i32
    %c4_i32_48 = arith.constant 4 : i32
    %179 = arith.muli %178, %c4_i32_48 : i32
    %180 = arith.index_cast %179 : i32 to index
    %181 = memref.load %arg3[%180] : memref<32xf32, #tpu.memory_space<smem>>
    %182 = vector.extract_strided_slice %5 {offsets = [0, 0, 0, 0], sizes = [1, 1, 8, 256], strides = [1, 1, 1, 1]} : vector<1x4x8x256xf32> to vector<1x1x8x256xf32>
    %183 = vector.shape_cast %182 : vector<1x1x8x256xf32> to vector<1x8x256xf32>
    %184 = vector.broadcast %181 : f32 to vector<1x8x256xf32>
    %185 = arith.mulf %184, %183 : vector<1x8x256xf32>
    %c4_i32_49 = arith.constant 4 : i32
    %186 = arith.addi %0, %c4_i32_49 : i32
    %c4_i32_50 = arith.constant 4 : i32
    %187 = arith.muli %186, %c4_i32_50 : i32
    %c1_i32_51 = arith.constant 1 : i32
    %188 = arith.addi %187, %c1_i32_51 : i32
    %189 = arith.index_cast %188 : i32 to index
    %190 = memref.load %arg3[%189] : memref<32xf32, #tpu.memory_space<smem>>
    %191 = vector.extract_strided_slice %5 {offsets = [0, 1, 0, 0], sizes = [1, 1, 8, 256], strides = [1, 1, 1, 1]} : vector<1x4x8x256xf32> to vector<1x1x8x256xf32>
    %192 = vector.shape_cast %191 : vector<1x1x8x256xf32> to vector<1x8x256xf32>
    %193 = vector.broadcast %190 : f32 to vector<1x8x256xf32>
    %194 = arith.mulf %193, %192 : vector<1x8x256xf32>
    %195 = arith.addf %185, %194 : vector<1x8x256xf32>
    %c4_i32_52 = arith.constant 4 : i32
    %196 = arith.addi %0, %c4_i32_52 : i32
    %c4_i32_53 = arith.constant 4 : i32
    %197 = arith.muli %196, %c4_i32_53 : i32
    %c2_i32_54 = arith.constant 2 : i32
    %198 = arith.addi %197, %c2_i32_54 : i32
    %199 = arith.index_cast %198 : i32 to index
    %200 = memref.load %arg3[%199] : memref<32xf32, #tpu.memory_space<smem>>
    %201 = vector.extract_strided_slice %5 {offsets = [0, 2, 0, 0], sizes = [1, 1, 8, 256], strides = [1, 1, 1, 1]} : vector<1x4x8x256xf32> to vector<1x1x8x256xf32>
    %202 = vector.shape_cast %201 : vector<1x1x8x256xf32> to vector<1x8x256xf32>
    %203 = vector.broadcast %200 : f32 to vector<1x8x256xf32>
    %204 = arith.mulf %203, %202 : vector<1x8x256xf32>
    %205 = arith.addf %195, %204 : vector<1x8x256xf32>
    %c4_i32_55 = arith.constant 4 : i32
    %206 = arith.addi %0, %c4_i32_55 : i32
    %c4_i32_56 = arith.constant 4 : i32
    %207 = arith.muli %206, %c4_i32_56 : i32
    %c3_i32_57 = arith.constant 3 : i32
    %208 = arith.addi %207, %c3_i32_57 : i32
    %209 = arith.index_cast %208 : i32 to index
    %210 = memref.load %arg3[%209] : memref<32xf32, #tpu.memory_space<smem>>
    %211 = vector.extract_strided_slice %5 {offsets = [0, 3, 0, 0], sizes = [1, 1, 8, 256], strides = [1, 1, 1, 1]} : vector<1x4x8x256xf32> to vector<1x1x8x256xf32>
    %212 = vector.shape_cast %211 : vector<1x1x8x256xf32> to vector<1x8x256xf32>
    %213 = vector.broadcast %210 : f32 to vector<1x8x256xf32>
    %214 = arith.mulf %213, %212 : vector<1x8x256xf32>
    %215 = arith.addf %205, %214 : vector<1x8x256xf32>
    %c4_i32_58 = arith.constant 4 : i32
    %216 = arith.addi %0, %c4_i32_58 : i32
    %217 = arith.index_cast %216 : i32 to index
    %218 = memref.load %arg4[%217] : memref<8xf32, #tpu.memory_space<smem>>
    %219 = vector.broadcast %218 : f32 to vector<1x8x256xf32>
    %220 = arith.addf %215, %219 : vector<1x8x256xf32>
    %c5_i32 = arith.constant 5 : i32
    %221 = arith.addi %0, %c5_i32 : i32
    %c4_i32_59 = arith.constant 4 : i32
    %222 = arith.muli %221, %c4_i32_59 : i32
    %223 = arith.index_cast %222 : i32 to index
    %224 = memref.load %arg3[%223] : memref<32xf32, #tpu.memory_space<smem>>
    %225 = vector.extract_strided_slice %5 {offsets = [0, 0, 0, 0], sizes = [1, 1, 8, 256], strides = [1, 1, 1, 1]} : vector<1x4x8x256xf32> to vector<1x1x8x256xf32>
    %226 = vector.shape_cast %225 : vector<1x1x8x256xf32> to vector<1x8x256xf32>
    %227 = vector.broadcast %224 : f32 to vector<1x8x256xf32>
    %228 = arith.mulf %227, %226 : vector<1x8x256xf32>
    %c5_i32_60 = arith.constant 5 : i32
    %229 = arith.addi %0, %c5_i32_60 : i32
    %c4_i32_61 = arith.constant 4 : i32
    %230 = arith.muli %229, %c4_i32_61 : i32
    %c1_i32_62 = arith.constant 1 : i32
    %231 = arith.addi %230, %c1_i32_62 : i32
    %232 = arith.index_cast %231 : i32 to index
    %233 = memref.load %arg3[%232] : memref<32xf32, #tpu.memory_space<smem>>
    %234 = vector.extract_strided_slice %5 {offsets = [0, 1, 0, 0], sizes = [1, 1, 8, 256], strides = [1, 1, 1, 1]} : vector<1x4x8x256xf32> to vector<1x1x8x256xf32>
    %235 = vector.shape_cast %234 : vector<1x1x8x256xf32> to vector<1x8x256xf32>
    %236 = vector.broadcast %233 : f32 to vector<1x8x256xf32>
    %237 = arith.mulf %236, %235 : vector<1x8x256xf32>
    %238 = arith.addf %228, %237 : vector<1x8x256xf32>
    %c5_i32_63 = arith.constant 5 : i32
    %239 = arith.addi %0, %c5_i32_63 : i32
    %c4_i32_64 = arith.constant 4 : i32
    %240 = arith.muli %239, %c4_i32_64 : i32
    %c2_i32_65 = arith.constant 2 : i32
    %241 = arith.addi %240, %c2_i32_65 : i32
    %242 = arith.index_cast %241 : i32 to index
    %243 = memref.load %arg3[%242] : memref<32xf32, #tpu.memory_space<smem>>
    %244 = vector.extract_strided_slice %5 {offsets = [0, 2, 0, 0], sizes = [1, 1, 8, 256], strides = [1, 1, 1, 1]} : vector<1x4x8x256xf32> to vector<1x1x8x256xf32>
    %245 = vector.shape_cast %244 : vector<1x1x8x256xf32> to vector<1x8x256xf32>
    %246 = vector.broadcast %243 : f32 to vector<1x8x256xf32>
    %247 = arith.mulf %246, %245 : vector<1x8x256xf32>
    %248 = arith.addf %238, %247 : vector<1x8x256xf32>
    %c5_i32_66 = arith.constant 5 : i32
    %249 = arith.addi %0, %c5_i32_66 : i32
    %c4_i32_67 = arith.constant 4 : i32
    %250 = arith.muli %249, %c4_i32_67 : i32
    %c3_i32_68 = arith.constant 3 : i32
    %251 = arith.addi %250, %c3_i32_68 : i32
    %252 = arith.index_cast %251 : i32 to index
    %253 = memref.load %arg3[%252] : memref<32xf32, #tpu.memory_space<smem>>
    %254 = vector.extract_strided_slice %5 {offsets = [0, 3, 0, 0], sizes = [1, 1, 8, 256], strides = [1, 1, 1, 1]} : vector<1x4x8x256xf32> to vector<1x1x8x256xf32>
    %255 = vector.shape_cast %254 : vector<1x1x8x256xf32> to vector<1x8x256xf32>
    %256 = vector.broadcast %253 : f32 to vector<1x8x256xf32>
    %257 = arith.mulf %256, %255 : vector<1x8x256xf32>
    %258 = arith.addf %248, %257 : vector<1x8x256xf32>
    %c5_i32_69 = arith.constant 5 : i32
    %259 = arith.addi %0, %c5_i32_69 : i32
    %260 = arith.index_cast %259 : i32 to index
    %261 = memref.load %arg4[%260] : memref<8xf32, #tpu.memory_space<smem>>
    %262 = vector.broadcast %261 : f32 to vector<1x8x256xf32>
    %263 = arith.addf %258, %262 : vector<1x8x256xf32>
    %c6_i32 = arith.constant 6 : i32
    %264 = arith.addi %0, %c6_i32 : i32
    %c4_i32_70 = arith.constant 4 : i32
    %265 = arith.muli %264, %c4_i32_70 : i32
    %266 = arith.index_cast %265 : i32 to index
    %267 = memref.load %arg3[%266] : memref<32xf32, #tpu.memory_space<smem>>
    %268 = vector.extract_strided_slice %5 {offsets = [0, 0, 0, 0], sizes = [1, 1, 8, 256], strides = [1, 1, 1, 1]} : vector<1x4x8x256xf32> to vector<1x1x8x256xf32>
    %269 = vector.shape_cast %268 : vector<1x1x8x256xf32> to vector<1x8x256xf32>
    %270 = vector.broadcast %267 : f32 to vector<1x8x256xf32>
    %271 = arith.mulf %270, %269 : vector<1x8x256xf32>
    %c6_i32_71 = arith.constant 6 : i32
    %272 = arith.addi %0, %c6_i32_71 : i32
    %c4_i32_72 = arith.constant 4 : i32
    %273 = arith.muli %272, %c4_i32_72 : i32
    %c1_i32_73 = arith.constant 1 : i32
    %274 = arith.addi %273, %c1_i32_73 : i32
    %275 = arith.index_cast %274 : i32 to index
    %276 = memref.load %arg3[%275] : memref<32xf32, #tpu.memory_space<smem>>
    %277 = vector.extract_strided_slice %5 {offsets = [0, 1, 0, 0], sizes = [1, 1, 8, 256], strides = [1, 1, 1, 1]} : vector<1x4x8x256xf32> to vector<1x1x8x256xf32>
    %278 = vector.shape_cast %277 : vector<1x1x8x256xf32> to vector<1x8x256xf32>
    %279 = vector.broadcast %276 : f32 to vector<1x8x256xf32>
    %280 = arith.mulf %279, %278 : vector<1x8x256xf32>
    %281 = arith.addf %271, %280 : vector<1x8x256xf32>
    %c6_i32_74 = arith.constant 6 : i32
    %282 = arith.addi %0, %c6_i32_74 : i32
    %c4_i32_75 = arith.constant 4 : i32
    %283 = arith.muli %282, %c4_i32_75 : i32
    %c2_i32_76 = arith.constant 2 : i32
    %284 = arith.addi %283, %c2_i32_76 : i32
    %285 = arith.index_cast %284 : i32 to index
    %286 = memref.load %arg3[%285] : memref<32xf32, #tpu.memory_space<smem>>
    %287 = vector.extract_strided_slice %5 {offsets = [0, 2, 0, 0], sizes = [1, 1, 8, 256], strides = [1, 1, 1, 1]} : vector<1x4x8x256xf32> to vector<1x1x8x256xf32>
    %288 = vector.shape_cast %287 : vector<1x1x8x256xf32> to vector<1x8x256xf32>
    %289 = vector.broadcast %286 : f32 to vector<1x8x256xf32>
    %290 = arith.mulf %289, %288 : vector<1x8x256xf32>
    %291 = arith.addf %281, %290 : vector<1x8x256xf32>
    %c6_i32_77 = arith.constant 6 : i32
    %292 = arith.addi %0, %c6_i32_77 : i32
    %c4_i32_78 = arith.constant 4 : i32
    %293 = arith.muli %292, %c4_i32_78 : i32
    %c3_i32_79 = arith.constant 3 : i32
    %294 = arith.addi %293, %c3_i32_79 : i32
    %295 = arith.index_cast %294 : i32 to index
    %296 = memref.load %arg3[%295] : memref<32xf32, #tpu.memory_space<smem>>
    %297 = vector.extract_strided_slice %5 {offsets = [0, 3, 0, 0], sizes = [1, 1, 8, 256], strides = [1, 1, 1, 1]} : vector<1x4x8x256xf32> to vector<1x1x8x256xf32>
    %298 = vector.shape_cast %297 : vector<1x1x8x256xf32> to vector<1x8x256xf32>
    %299 = vector.broadcast %296 : f32 to vector<1x8x256xf32>
    %300 = arith.mulf %299, %298 : vector<1x8x256xf32>
    %301 = arith.addf %291, %300 : vector<1x8x256xf32>
    %c6_i32_80 = arith.constant 6 : i32
    %302 = arith.addi %0, %c6_i32_80 : i32
    %303 = arith.index_cast %302 : i32 to index
    %304 = memref.load %arg4[%303] : memref<8xf32, #tpu.memory_space<smem>>
    %305 = vector.broadcast %304 : f32 to vector<1x8x256xf32>
    %306 = arith.addf %301, %305 : vector<1x8x256xf32>
    %c7_i32 = arith.constant 7 : i32
    %307 = arith.addi %0, %c7_i32 : i32
    %c4_i32_81 = arith.constant 4 : i32
    %308 = arith.muli %307, %c4_i32_81 : i32
    %309 = arith.index_cast %308 : i32 to index
    %310 = memref.load %arg3[%309] : memref<32xf32, #tpu.memory_space<smem>>
    %311 = vector.extract_strided_slice %5 {offsets = [0, 0, 0, 0], sizes = [1, 1, 8, 256], strides = [1, 1, 1, 1]} : vector<1x4x8x256xf32> to vector<1x1x8x256xf32>
    %312 = vector.shape_cast %311 : vector<1x1x8x256xf32> to vector<1x8x256xf32>
    %313 = vector.broadcast %310 : f32 to vector<1x8x256xf32>
    %314 = arith.mulf %313, %312 : vector<1x8x256xf32>
    %c7_i32_82 = arith.constant 7 : i32
    %315 = arith.addi %0, %c7_i32_82 : i32
    %c4_i32_83 = arith.constant 4 : i32
    %316 = arith.muli %315, %c4_i32_83 : i32
    %c1_i32_84 = arith.constant 1 : i32
    %317 = arith.addi %316, %c1_i32_84 : i32
    %318 = arith.index_cast %317 : i32 to index
    %319 = memref.load %arg3[%318] : memref<32xf32, #tpu.memory_space<smem>>
    %320 = vector.extract_strided_slice %5 {offsets = [0, 1, 0, 0], sizes = [1, 1, 8, 256], strides = [1, 1, 1, 1]} : vector<1x4x8x256xf32> to vector<1x1x8x256xf32>
    %321 = vector.shape_cast %320 : vector<1x1x8x256xf32> to vector<1x8x256xf32>
    %322 = vector.broadcast %319 : f32 to vector<1x8x256xf32>
    %323 = arith.mulf %322, %321 : vector<1x8x256xf32>
    %324 = arith.addf %314, %323 : vector<1x8x256xf32>
    %c7_i32_85 = arith.constant 7 : i32
    %325 = arith.addi %0, %c7_i32_85 : i32
    %c4_i32_86 = arith.constant 4 : i32
    %326 = arith.muli %325, %c4_i32_86 : i32
    %c2_i32_87 = arith.constant 2 : i32
    %327 = arith.addi %326, %c2_i32_87 : i32
    %328 = arith.index_cast %327 : i32 to index
    %329 = memref.load %arg3[%328] : memref<32xf32, #tpu.memory_space<smem>>
    %330 = vector.extract_strided_slice %5 {offsets = [0, 2, 0, 0], sizes = [1, 1, 8, 256], strides = [1, 1, 1, 1]} : vector<1x4x8x256xf32> to vector<1x1x8x256xf32>
    %331 = vector.shape_cast %330 : vector<1x1x8x256xf32> to vector<1x8x256xf32>
    %332 = vector.broadcast %329 : f32 to vector<1x8x256xf32>
    %333 = arith.mulf %332, %331 : vector<1x8x256xf32>
    %334 = arith.addf %324, %333 : vector<1x8x256xf32>
    %c7_i32_88 = arith.constant 7 : i32
    %335 = arith.addi %0, %c7_i32_88 : i32
    %c4_i32_89 = arith.constant 4 : i32
    %336 = arith.muli %335, %c4_i32_89 : i32
    %c3_i32_90 = arith.constant 3 : i32
    %337 = arith.addi %336, %c3_i32_90 : i32
    %338 = arith.index_cast %337 : i32 to index
    %339 = memref.load %arg3[%338] : memref<32xf32, #tpu.memory_space<smem>>
    %340 = vector.extract_strided_slice %5 {offsets = [0, 3, 0, 0], sizes = [1, 1, 8, 256], strides = [1, 1, 1, 1]} : vector<1x4x8x256xf32> to vector<1x1x8x256xf32>
    %341 = vector.shape_cast %340 : vector<1x1x8x256xf32> to vector<1x8x256xf32>
    %342 = vector.broadcast %339 : f32 to vector<1x8x256xf32>
    %343 = arith.mulf %342, %341 : vector<1x8x256xf32>
    %344 = arith.addf %334, %343 : vector<1x8x256xf32>
    %c7_i32_91 = arith.constant 7 : i32
    %345 = arith.addi %0, %c7_i32_91 : i32
    %346 = arith.index_cast %345 : i32 to index
    %347 = memref.load %arg4[%346] : memref<8xf32, #tpu.memory_space<smem>>
    %348 = vector.broadcast %347 : f32 to vector<1x8x256xf32>
    %349 = arith.addf %344, %348 : vector<1x8x256xf32>
    %350 = vector.shape_cast %48 : vector<1x8x256xf32> to vector<1x1x8x256xf32>
    %351 = vector.shape_cast %91 : vector<1x8x256xf32> to vector<1x1x8x256xf32>
    %352 = vector.shape_cast %134 : vector<1x8x256xf32> to vector<1x1x8x256xf32>
    %353 = vector.shape_cast %177 : vector<1x8x256xf32> to vector<1x1x8x256xf32>
    %354 = vector.shape_cast %220 : vector<1x8x256xf32> to vector<1x1x8x256xf32>
    %355 = vector.shape_cast %263 : vector<1x8x256xf32> to vector<1x1x8x256xf32>
    %356 = vector.shape_cast %306 : vector<1x8x256xf32> to vector<1x1x8x256xf32>
    %357 = vector.shape_cast %349 : vector<1x8x256xf32> to vector<1x1x8x256xf32>
    %358 = tpu.concatenate %350, %351, %352, %353, %354, %355, %356, %357 in 1 : vector<1x1x8x256xf32>, vector<1x1x8x256xf32>, vector<1x1x8x256xf32>, vector<1x1x8x256xf32>, vector<1x1x8x256xf32>, vector<1x1x8x256xf32>, vector<1x1x8x256xf32>, vector<1x1x8x256xf32> -> vector<1x8x8x256xf32>
    %359 = vector.extract_strided_slice %358 {offsets = [0, 0, 0, 0], sizes = [1, 8, 1, 256], strides = [1, 1, 1, 1]} : vector<1x8x8x256xf32> to vector<1x8x1x256xf32>
    %360 = vector.extract_strided_slice %358 {offsets = [0, 0, 0, 0], sizes = [1, 8, 7, 256], strides = [1, 1, 1, 1]} : vector<1x8x8x256xf32> to vector<1x8x7x256xf32>
    %361 = tpu.concatenate %359, %360 in 2 : vector<1x8x1x256xf32>, vector<1x8x7x256xf32> -> vector<1x8x8x256xf32>
    %362 = vector.extract_strided_slice %358 {offsets = [0, 0, 1, 0], sizes = [1, 8, 7, 256], strides = [1, 1, 1, 1]} : vector<1x8x8x256xf32> to vector<1x8x7x256xf32>
    %363 = vector.extract_strided_slice %358 {offsets = [0, 0, 7, 0], sizes = [1, 8, 1, 256], strides = [1, 1, 1, 1]} : vector<1x8x8x256xf32> to vector<1x8x1x256xf32>
    %364 = tpu.concatenate %362, %363 in 2 : vector<1x8x7x256xf32>, vector<1x8x1x256xf32> -> vector<1x8x8x256xf32>
    %cst_92 = arith.constant 7.500000e-01 : f32
    %365 = vector.broadcast %cst_92 : f32 to vector<1x8x8x256xf32>
    %366 = arith.mulf %365, %358 : vector<1x8x8x256xf32>
    %cst_93 = arith.constant 2.500000e-01 : f32
    %367 = vector.broadcast %cst_93 : f32 to vector<1x8x8x256xf32>
    %368 = arith.mulf %367, %361 : vector<1x8x8x256xf32>
    %369 = arith.addf %366, %368 : vector<1x8x8x256xf32>
    %c0_94 = arith.constant 0 : index
    %c0_95 = arith.constant 0 : index
    %c0_96 = arith.constant 0 : index
    %c0_97 = arith.constant 0 : index
    %370 = vector.load %arg6[%c0_94, %c0_95, %c0_96, %c0_97] : memref<1x8x8x512xf32, #tpu.memory_space<vmem>>, vector<1x8x8x256xf32>
    tpu.vector_store %arg6[%c0_94, %c0_95, %c0_96, %c0_97], %369 {strides = array<i32>} : memref<1x8x8x512xf32, #tpu.memory_space<vmem>>, vector<1x8x8x256xf32>,
    %cst_98 = arith.constant 7.500000e-01 : f32
    %371 = vector.broadcast %cst_98 : f32 to vector<1x8x8x256xf32>
    %372 = arith.mulf %371, %358 : vector<1x8x8x256xf32>
    %cst_99 = arith.constant 2.500000e-01 : f32
    %373 = vector.broadcast %cst_99 : f32 to vector<1x8x8x256xf32>
    %374 = arith.mulf %373, %364 : vector<1x8x8x256xf32>
    %375 = arith.addf %372, %374 : vector<1x8x8x256xf32>
    %c0_100 = arith.constant 0 : index
    %c0_101 = arith.constant 0 : index
    %c0_102 = arith.constant 0 : index
    %c256 = arith.constant 256 : index
    %376 = vector.load %arg6[%c0_100, %c0_101, %c0_102, %c256] : memref<1x8x8x512xf32, #tpu.memory_space<vmem>>, vector<1x8x8x256xf32>
    tpu.vector_store %arg6[%c0_100, %c0_101, %c0_102, %c256], %375 {strides = array<i32>} : memref<1x8x8x512xf32, #tpu.memory_space<vmem>>, vector<1x8x8x256xf32>,
    return
  }
  func.func @transform_0(%arg0: i32, %arg1: i32) -> (i32, i32, i32) {
    %c0_i32 = arith.constant 0 : i32
    %c0_i32_0 = arith.constant 0 : i32
    %c0_i32_1 = arith.constant 0 : i32
    return %arg0, %c0_i32, %c0_i32_0 : i32, i32, i32
  }
  func.func @transform_1(%arg0: i32, %arg1: i32) -> i32 {
    %c0_i32 = arith.constant 0 : i32
    %c0_i32_0 = arith.constant 0 : i32
    return %c0_i32 : i32
  }
  func.func @transform_2(%arg0: i32, %arg1: i32) -> i32 {
    %c0_i32 = arith.constant 0 : i32
    %c0_i32_0 = arith.constant 0 : i32
    return %c0_i32 : i32
  }
  func.func @transform_3(%arg0: i32, %arg1: i32) -> (i32, i32) {
    %c0_i32 = arith.constant 0 : i32
    %c0_i32_0 = arith.constant 0 : i32
    %c0_i32_1 = arith.constant 0 : i32
    return %c0_i32, %c0_i32_0 : i32, i32
  }
  func.func @transform_4(%arg0: i32, %arg1: i32) -> (i32, i32, i32, i32) {
    %c0_i32 = arith.constant 0 : i32
    %c0_i32_0 = arith.constant 0 : i32
    %c0_i32_1 = arith.constant 0 : i32
    return %arg0, %arg1, %c0_i32, %c0_i32_0 : i32, i32, i32, i32
  }
}

</mosaic_0001>

<llo_original>
// kernel: tpu_custom_call.1
$region0: #{tpu_custom_call.1}
  #allocation0 [shape = 'u32[]', space=smem, size = 0x4, offset = 0x4, fixed_abs, tag = 'smem constant byte address 0x4 - core index']
  #allocation1 [shape = 'u32[144,128]{1,0:T(1,128)}', space=vmem, size = 0x12000, scoped, tag = 'internal scratch']
  %s0 = inlined_call_operand.hbm [shape: f32[2,32,64], index: 0, kind: input, shape index: {}]
  %s1 = inlined_call_operand.vmem [shape: f32[32], index: 1, kind: input, shape index: {}]
  %s2 = inlined_call_operand.vmem [shape: f32[8], index: 2, kind: input, shape index: {}]
  %s3 = inlined_call_operand.hbm [shape: f32[64,256], index: 3, kind: input, shape index: {}]
  %s4 = inlined_call_operand.hbm [shape: f32[2,8,8,512], index: 4, kind: output, shape index: {}]
  %s5 = sld [smem:[#allocation0]]
  $region65: #{tpu_custom_call.1} parent=0
    _
  %s7 = ssub.s32 1, %s5
  %s8 = scalar_select 0, %s7, %s5
  $region1: #{tpu_custom_call.1} parent=0
    #allocation2 [shape = 'u8[32768]{0}', space=vmem, size = 0x8000, scoped, tag = 'input window, operand 0']
    #allocation3 [shape = 's32[2]{0}', space=sflag, size = 0x8, scoped, tag = 'scoped memory for tpu_custom_call.1']
    #allocation4 [shape = 's32[2]{0}', space=sflag, size = 0x8, scoped, tag = 'scoped memory for tpu_custom_call.1']
    #allocation5 [shape = 's32[2]{0}', space=sflag, size = 0x8, scoped, tag = 'scoped memory for tpu_custom_call.1']
    #allocation6 [shape = 'u8[512]{0}', space=smem, size = 0x200, scoped, tag = 'input window, operand 1, single buffered']
    #allocation7 [shape = 'u8[512]{0}', space=smem, size = 0x200, scoped, tag = 'input window, operand 2, single buffered']
    #allocation8 [shape = 's32[1]{0}', space=sflag, size = 0x4, scoped, tag = 'scoped memory for tpu_custom_call.1']
    #allocation9 [shape = 'u8[65536]{0}', space=vmem, size = 0x10000, scoped, tag = 'input window, operand 3, single buffered']
    #allocation10 [shape = 's32[1]{0}', space=sflag, size = 0x4, scoped, tag = 'scoped memory for tpu_custom_call.1']
    #allocation11 [shape = 'u8[262144]{0}', space=vmem, size = 0x40000, scoped, tag = 'output window, operand 0']
    %9 = vsyncpa [#allocation3], 0
    %s10 = scalar_lea.sflag [#allocation3], 1
    %11 = vsyncpa %s10, 0
    %12 = vsyncpa [#allocation5], 0
    %13 = vsyncpa [#allocation8], 0
    %14 = vsyncpa [#allocation10], 0
    %15 = vsyncpa [#allocation4], 0
    %s16 = scalar_lea.sflag [#allocation4], 1
    %17 = vsyncpa %s16, 0
    loop: start=0, step=1, limit=4
    $region2: #{tpu_custom_call.1} parent=1 // loop_pre_header
      _
    $region3: #{tpu_custom_call.1} parent=1 // loop_header
      %s19 = sphi 0, %s23
      %p20 = scmp.ge.s32.totalorder %s19, 4
      %s26 = sphi 0, %s38
      %s27 = sphi 0, %s34
      %s28 = sphi 0, %s26
      %s29 = sphi 0, %s27
      %s30 = sphi 0, %s28
      %s31 = sphi 0, %s29
      %s41 = sphi 0, %s43
      %s44 = sphi 0, %s41
      %s45 = sphi 0, %s44
      %s61 = sphi 0, %s45
      %s65 = sphi 0, %s65
      %s67 = sphi 0, %s65
      %s68 = sphi 0, %s67
      %s82 = sphi 0, %s68
      %s86 = sphi 0, %s86
      %s88 = sphi 0, %s86
      %s89 = sphi 0, %s88
      %s103 = sphi 0, %s89
      %s107 = sphi 0, %s107
      %s109 = sphi 0, %s107
      %s110 = sphi 0, %s109
      %s124 = sphi 0, %s110
      %s132 = sphi 0, %s134
      %s135 = sphi 0, %s132
      %s136 = sphi 0, %s135
      %s152 = sphi 0, %s136
    $region4: #{tpu_custom_call.1} parent=1 // loop_header_branch
      %22 = sbr.rel (%p20) target = $region8
    $region5: #{tpu_custom_call.1} parent=1 // loop_body
      %s24 = ssub.s32 %s19, 1
      %s25 = ssub.s32 %s19, 2
      %s32 = sadd.s32 1, %s27
      %p33 = scmp.ge.s32.totalorder %s32, 1
      %s34 = scalar_select %p33, 0, %s32
      %s35 = sadd.s32 1, %s26
      %s36 = scalar_select %p33, %s35, %s26
      %p37 = scmp.ge.s32.totalorder %s36, 2
      %s38 = scalar_select %p37, 0, %s36
      %s39 = ssub.s32 %s26, %s38
      %p40 = scmp.eq.s32.totalorder %s39, 0
      %s42 = sadd.s32 %s41, 1
      %s43 = scalar_select %p40, %s41, %s42
      %p46 = pneg %p40
      %p47 = scmp.eq.s32.totalorder %s19, 1
      %p48 = por %p46, %p47
      %p49 = scmp.ne.s32.totalorder %s41, %s44
      %p50 = scmp.eq.s32.totalorder %s19, 0
      %p51 = por %p49, %p50
      %p52 = scmp.ne.s32.totalorder %s41, %s44
      %p53 = scmp.eq.s32.totalorder %s24, 1
      %p54 = por %p52, %p53
      %p55 = scmp.ne.s32.totalorder %s44, %s45
      %p56 = scmp.eq.s32.totalorder %s24, 0
      %p57 = por %p55, %p56
      %p58 = scmp.ne.s32.totalorder %s44, %s45
      %p59 = scmp.eq.s32.totalorder %s25, 1
      %p60 = por %p58, %p59
      %p62 = scmp.ne.s32.totalorder %s45, %s61
      %p63 = scmp.eq.s32.totalorder %s25, 0
      %p64 = por %p62, %p63
      %s66 = sadd.s32 %s65, 1
      %p69 = scmp.eq.s32.totalorder %s19, 1
      %p70 = scmp.ne.s32.totalorder %s65, %s67
      %p71 = scmp.eq.s32.totalorder %s19, 0
      %p72 = por %p70, %p71
      %p73 = scmp.ne.s32.totalorder %s65, %s67
      %p74 = scmp.eq.s32.totalorder %s24, 1
      %p75 = por %p73, %p74
      %p76 = scmp.ne.s32.totalorder %s67, %s68
      %p77 = scmp.eq.s32.totalorder %s24, 0
      %p78 = por %p76, %p77
      %p79 = scmp.ne.s32.totalorder %s67, %s68
      %p80 = scmp.eq.s32.totalorder %s25, 1
      %p81 = por %p79, %p80
      %p83 = scmp.ne.s32.totalorder %s68, %s82
      %p84 = scmp.eq.s32.totalorder %s25, 0
      %p85 = por %p83, %p84
      %s87 = sadd.s32 %s86, 1
      %p90 = scmp.eq.s32.totalorder %s19, 1
      %p91 = scmp.ne.s32.totalorder %s86, %s88
      %p92 = scmp.eq.s32.totalorder %s19, 0
      %p93 = por %p91, %p92
      %p94 = scmp.ne.s32.totalorder %s86, %s88
      %p95 = scmp.eq.s32.totalorder %s24, 1
      %p96 = por %p94, %p95
      %p97 = scmp.ne.s32.totalorder %s88, %s89
      %p98 = scmp.eq.s32.totalorder %s24, 0
      %p99 = por %p97, %p98
      %p100 = scmp.ne.s32.totalorder %s88, %s89
      %p101 = scmp.eq.s32.totalorder %s25, 1
      %p102 = por %p100, %p101
      %p104 = scmp.ne.s32.totalorder %s89, %s103
      %p105 = scmp.eq.s32.totalorder %s25, 0
      %p106 = por %p104, %p105
      %s108 = sadd.s32 %s107, 1
      %p111 = scmp.eq.s32.totalorder %s19, 1
      %p112 = scmp.ne.s32.totalorder %s107, %s109
      %p113 = scmp.eq.s32.totalorder %s19, 0
      %p114 = por %p112, %p113
      %p115 = scmp.ne.s32.totalorder %s107, %s109
      %p116 = scmp.eq.s32.totalorder %s24, 1
      %p117 = por %p115, %p116
      %p118 = scmp.ne.s32.totalorder %s109, %s110
      %p119 = scmp.eq.s32.totalorder %s24, 0
      %p120 = por %p118, %p119
      %p121 = scmp.ne.s32.totalorder %s109, %s110
      %p122 = scmp.eq.s32.totalorder %s25, 1
      %p123 = por %p121, %p122
      %p125 = scmp.ne.s32.totalorder %s110, %s124
      %p126 = scmp.eq.s32.totalorder %s25, 0
      %p127 = por %p125, %p126
      %s128 = ssub.s32 %s26, %s38
      %s129 = ssub.s32 %s27, %s34
      %s130 = sor.u32 %s128, %s129
      %p131 = scmp.eq.s32.totalorder %s130, 0
      %s133 = sadd.s32 %s132, 1
      %s134 = scalar_select %p131, %s132, %s133
      %p137 = pneg %p131
      %p138 = scmp.eq.s32.totalorder %s19, 1
      %p139 = por %p137, %p138
      %p140 = scmp.ne.s32.totalorder %s132, %s135
      %p141 = scmp.eq.s32.totalorder %s19, 0
      %p142 = por %p140, %p141
      %p143 = scmp.ne.s32.totalorder %s132, %s135
      %p144 = scmp.eq.s32.totalorder %s24, 1
      %p145 = por %p143, %p144
      %p146 = scmp.ne.s32.totalorder %s135, %s136
      %p147 = scmp.eq.s32.totalorder %s24, 0
      %p148 = por %p146, %p147
      %p149 = scmp.ne.s32.totalorder %s135, %s136
      %p150 = scmp.eq.s32.totalorder %s25, 1
      %p151 = por %p149, %p150
      %p153 = scmp.ne.s32.totalorder %s136, %s152
      %p154 = scmp.eq.s32.totalorder %s25, 0
      %p155 = por %p153, %p154
      %p156 = scmp.le.s32.totalorder 1, %s19
      %p157 = scmp.lt.s32.totalorder %s19, 3
      %p158 = pnand %p156, %p157
      %p159 = pneg %p158
      // Predicated region
      $region9: #{tpu_custom_call.1} parent=5 // pred_check
        _
      $region10: #{tpu_custom_call.1} parent=5 // pred_check_branch
        %161 = sbr.rel (%p158) target = $region12
      $region11: #{tpu_custom_call.1} parent=5 // pred_region
        %s162 = ssub.s32 %s19, 1
        // Predicated region
        $region13: #{tpu_custom_call.1} parent=11 // pred_check
          %p163 = pneg %p78
        $region14: #{tpu_custom_call.1} parent=11 // pred_check_branch
          %165 = sbr.rel (%p163) target = $region16
        $region15: #{tpu_custom_call.1} parent=11 // pred_region
          %s167 = ssub.s32 16, 16
          %168 = vsyncadd [#allocation5], %s167
          %s170 = sshll.u32 %s1, 4
          %s171 = int_to_ptr.vmem [resolvable:$true] %s170
          %173 = dma.vmem_to_smem %s171, 16, [#allocation6], [#allocation5]
        $region16: #{tpu_custom_call.1} parent=11 // pred_fallthru
          _
        // Predicated region
        $region17: #{tpu_custom_call.1} parent=11 // pred_check
          %p174 = pneg %p99
        $region18: #{tpu_custom_call.1} parent=11 // pred_check_branch
          %176 = sbr.rel (%p174) target = $region20
        $region19: #{tpu_custom_call.1} parent=11 // pred_region
          %s178 = ssub.s32 16, 16
          %179 = vsyncadd [#allocation8], %s178
          %s181 = sshll.u32 %s2, 4
          %s182 = int_to_ptr.vmem [resolvable:$true] %s181
          %184 = dma.vmem_to_smem %s182, 16, [#allocation7], [#allocation8]
        $region20: #{tpu_custom_call.1} parent=11 // pred_fallthru
          _
        // Predicated region
        $region21: #{tpu_custom_call.1} parent=11 // pred_check
          %p185 = pneg %p120
        $region22: #{tpu_custom_call.1} parent=11 // pred_check_branch
          %187 = sbr.rel (%p185) target = $region24
        $region23: #{tpu_custom_call.1} parent=11 // pred_region
          %s189 = ssub.s32 2048, 2048
          %190 = vsyncadd [#allocation10], %s189
          %s191 = sshll.u32 [#allocation9], 4
          %s192 = int_to_ptr.vmem [resolvable:$true] %s191
          %197 = dma.hbm_to_vmem [thread:$0]  %s3, 2048, %s192, [#allocation10], 256, 256, 16
        $region24: #{tpu_custom_call.1} parent=11 // pred_fallthru
          _
      $region12: #{tpu_custom_call.1} parent=5 // pred_fallthru
        _
      %p198 = scmp.lt.s32.totalorder %s19, 2
      // Predicated region
      $region25: #{tpu_custom_call.1} parent=5 // pred_check
        %p199 = pneg %p198
      $region26: #{tpu_custom_call.1} parent=5 // pred_check_branch
        %201 = sbr.rel (%p199) target = $region28
      $region27: #{tpu_custom_call.1} parent=5 // pred_region
        // Predicated region
        $region29: #{tpu_custom_call.1} parent=27 // pred_check
          %p202 = pneg %p51
        $region30: #{tpu_custom_call.1} parent=27 // pred_check_branch
          %204 = sbr.rel (%p202) target = $region32
        $region31: #{tpu_custom_call.1} parent=27 // pred_region
          %s205 = sand.u32 %s41, 1
          %s206 = scalar_lea.sflag [#allocation3], %s205
          %s207 = sand.u32 %s41, 1
          %s208 = smul.addr %s207, 32
          %s209 = scalar_lea.vmem [#allocation2], %s208
          %s211 = ssub.s32 512, 512
          %212 = vsyncadd %s206, %s211
          %s213 = smul.addr %s26, 4
          %s214 = smul.addr %s213, 128
          %s215 = scalar_lea.hbm %s0, %s214
          %s216 = sshll.u32 %s209, 4
          %s217 = int_to_ptr.vmem [resolvable:$true] %s216
          %222 = dma.hbm_to_vmem [thread:$0]  %s215, 512, %s217, %s206, 128, 128, 8
        $region32: #{tpu_custom_call.1} parent=27 // pred_fallthru
          _
      $region28: #{tpu_custom_call.1} parent=5 // pred_fallthru
        _
      %p223 = scmp.le.s32.totalorder 1, %s19
      %p224 = scmp.lt.s32.totalorder %s19, 3
      %p225 = pnand %p223, %p224
      %p226 = pneg %p225
      // Predicated region
      $region33: #{tpu_custom_call.1} parent=5 // pred_check
        _
      $region34: #{tpu_custom_call.1} parent=5 // pred_check_branch
        %228 = sbr.rel (%p225) target = $region36
      $region35: #{tpu_custom_call.1} parent=5 // pred_region
        %s229 = ssub.s32 %s19, 1
        %s230 = sand.u32 %s44, 1
        %s231 = scalar_lea.sflag [#allocation3], %s230
        %s232 = sand.u32 %s44, 1
        %s233 = smul.addr %s232, 32
        %s234 = scalar_lea.vmem [#allocation2], %s233
        // Predicated region
        $region37: #{tpu_custom_call.1} parent=35 // pred_check
          %p235 = pneg %p57
        $region38: #{tpu_custom_call.1} parent=35 // pred_check_branch
          %237 = sbr.rel (%p235) target = $region40
        $region39: #{tpu_custom_call.1} parent=35 // pred_region
          %238 = dma.done %s231, 512
        $region40: #{tpu_custom_call.1} parent=35 // pred_fallthru
          _
        // Predicated region
        $region41: #{tpu_custom_call.1} parent=35 // pred_check
          %p239 = pneg %p78
        $region42: #{tpu_custom_call.1} parent=35 // pred_check_branch
          %241 = sbr.rel (%p239) target = $region44
        $region43: #{tpu_custom_call.1} parent=35 // pred_region
          %242 = dma.done [#allocation5], 16
        $region44: #{tpu_custom_call.1} parent=35 // pred_fallthru
          _
        // Predicated region
        $region45: #{tpu_custom_call.1} parent=35 // pred_check
          %p243 = pneg %p99
        $region46: #{tpu_custom_call.1} parent=35 // pred_check_branch
          %245 = sbr.rel (%p243) target = $region48
        $region47: #{tpu_custom_call.1} parent=35 // pred_region
          %246 = dma.done [#allocation8], 16
        $region48: #{tpu_custom_call.1} parent=35 // pred_fallthru
          _
        // Predicated region
        $region49: #{tpu_custom_call.1} parent=35 // pred_check
          %p247 = pneg %p120
        $region50: #{tpu_custom_call.1} parent=35 // pred_check_branch
          %249 = sbr.rel (%p247) target = $region52
        $region51: #{tpu_custom_call.1} parent=35 // pred_region
          %250 = dma.done [#allocation10], 2048
        $region52: #{tpu_custom_call.1} parent=35 // pred_fallthru
          _
        %251 = sfence
        %s252 = sand.u32 %s44, 1
        %s253 = scalar_lea.sflag [#allocation3], %s252
        %s254 = sand.u32 %s44, 1
        %s255 = smul.addr %s254, 32
        %s256 = scalar_lea.vmem [#allocation2], %s255
        %p257 = pneg %p57
        %p258 = pneg %p54
        %p259 = pneg %p78
        %p260 = pneg %p75
        %p261 = pneg %p99
        %p262 = pneg %p96
        %p263 = pneg %p120
        %p264 = pneg %p117
        %p265 = pneg %p148
        %p266 = pneg %p145
        %s267 = sand.u32 %s135, 1
        %s268 = scalar_lea.sflag [#allocation4], %s267
        %s269 = sand.u32 %s135, 1
        %s270 = smul.addr %s269, 256
        %s271 = scalar_lea.vmem [#allocation11], %s270
        %s272 = smul.u32 8, %s29
        %s273 = smul.u32 %s29, 8
        %v274 = vld [vmem:[#allocation9] sm:$0xff]
        %v275 = vld [vmem:[#allocation9 + $0x8] sm:$0xff]
        %v276 = vld [vmem:[#allocation9 + $0x10] sm:$0xff]
        %v277 = vld [vmem:[#allocation9 + $0x18] sm:$0xff]
        %v278 = vld [vmem:[#allocation9 + $0x20] sm:$0xff]
        %v279 = vld [vmem:[#allocation9 + $0x28] sm:$0xff]
        %v280 = vld [vmem:[#allocation9 + $0x30] sm:$0xff]
        %v281 = vld [vmem:[#allocation9 + $0x38] sm:$0xff]
        %v282 = vld [vmem:[#allocation9 + $0x40] sm:$0xff]
        %v283 = vld [vmem:[#allocation9 + $0x48] sm:$0xff]
        %v284 = vld [vmem:[#allocation9 + $0x50] sm:$0xff]
        %v285 = vld [vmem:[#allocation9 + $0x58] sm:$0xff]
        %v286 = vld [vmem:[#allocation9 + $0x60] sm:$0xff]
        %v287 = vld [vmem:[#allocation9 + $0x68] sm:$0xff]
        %v288 = vld [vmem:[#allocation9 + $0x70] sm:$0xff]
        %v289 = vld [vmem:[#allocation9 + $0x78] sm:$0xff]
        %v290 = vld [vmem:[%s234] sm:$0xff]
        %v291 = vld [vmem:[%s234 + $0x8] sm:$0xff]
        %v292 = vld [vmem:[%s234 + $0x10] sm:$0xff]
        %v293 = vld [vmem:[%s234 + $0x18] sm:$0xff]
        %vm294 = vcmask 523264
        %v296 = vsel %vm294, %v290, 0
        %v299 = vsel %vm294, %v291, 0
        %v302 = vsel %vm294, %v292, 0
        %v305 = vsel %vm294, %v293, 0
        %v307 = vand.u32 %v275, 4294901760
        %308 = vmatprep.subr.mxu0 %v307
        %v309 = vand.u32 %v274, 4294901760
        %310 = vmatpush1.msra.mxu0 %v309
        %v311 = vand.u32 %v277, 4294901760
        %312 = vmatprep.subr.mxu0 %v311
        %v313 = vand.u32 %v276, 4294901760
        %314 = vmatpush1.msra.mxu0 %v313
        %v315 = vand.u32 %v279, 4294901760
        %316 = vmatprep.subr.mxu0 %v315
        %v317 = vand.u32 %v278, 4294901760
        %318 = vmatpush1.msra.mxu0 %v317
        %v319 = vand.u32 %v281, 4294901760
        %320 = vmatprep.subr.mxu0 %v319
        %v321 = vand.u32 %v280, 4294901760
        %322 = vmatpush1.msra.mxu0 %v321
        %v323 = vand.u32 %v283, 4294901760
        %324 = vmatprep.subr.mxu0 %v323
        %v325 = vand.u32 %v282, 4294901760
        %326 = vmatpush1.msra.mxu0 %v325
        %v327 = vand.u32 %v285, 4294901760
        %328 = vmatprep.subr.mxu0 %v327
        %v329 = vand.u32 %v284, 4294901760
        %330 = vmatpush1.msra.mxu0 %v329
        %v331 = vand.u32 %v287, 4294901760
        %332 = vmatprep.subr.mxu0 %v331
        %v333 = vand.u32 %v286, 4294901760
        %334 = vmatpush1.msra.mxu0 %v333
        %v335 = vand.u32 %v289, 4294901760
        %336 = vmatprep.subr.mxu0 %v335
        %v337 = vand.u32 %v288, 4294901760
        %338 = vmatpush1.msra.mxu0 %v337
        %339 = vmatprep.subr.mxu0 0.0
        %340 = vmatpush1.msra.mxu0 0.0
        %341 = vmatprep.subr.mxu0 0.0
        %342 = vmatpush1.msra.mxu0 0.0
        %343 = vmatprep.subr.mxu0 0.0
        %344 = vmatpush1.msra.mxu0 0.0
        %345 = vmatprep.subr.mxu0 0.0
        %346 = vmatpush1.msra.mxu0 0.0
        %347 = vmatprep.subr.mxu0 0.0
        %348 = vmatpush1.msra.mxu0 0.0
        %349 = vmatprep.subr.mxu0 0.0
        %350 = vmatpush1.msra.mxu0 0.0
        %351 = vmatprep.subr.mxu0 0.0
        %352 = vmatpush1.msra.mxu0 0.0
        %353 = vmatprep.subr.mxu0 0.0
        %354 = vmatpush1.msra.mxu0 0.0
        %355 = vmatprep.subr.mxu0 0.0
        %356 = vmatpush1.msra.mxu0 0.0
        %357 = vmatprep.subr.mxu0 0.0
        %358 = vmatpush1.msra.mxu0 0.0
        %359 = vmatprep.subr.mxu0 0.0
        %360 = vmatpush1.msra.mxu0 0.0
        %361 = vmatprep.subr.mxu0 0.0
        %362 = vmatpush1.msra.mxu0 0.0
        %363 = vmatprep.subr.mxu0 0.0
        %364 = vmatpush1.msra.mxu0 0.0
        %365 = vmatprep.subr.mxu0 0.0
        %366 = vmatpush1.msra.mxu0 0.0
        %367 = vmatprep.subr.mxu0 0.0
        %368 = vmatpush1.msra.mxu0 0.0
        %369 = vmatprep.subr.mxu0 0.0
        %370 = vmatpush1.msra.mxu0 0.0
        %371 = vmatprep.subr.mxu0 0.0
        %372 = vmatpush1.msra.mxu0 0.0
        %373 = vmatprep.subr.mxu0 0.0
        %374 = vmatpush1.msra.mxu0 0.0
        %375 = vmatprep.subr.mxu0 0.0
        %376 = vmatpush1.msra.mxu0 0.0
        %377 = vmatprep.subr.mxu0 0.0
        %378 = vmatpush1.msra.mxu0 0.0
        %379 = vmatprep.subr.mxu0 0.0
        %380 = vmatpush1.msra.mxu0 0.0
        %381 = vmatprep.subr.mxu0 0.0
        %382 = vmatpush1.msra.mxu0 0.0
        %383 = vmatprep.subr.mxu0 0.0
        %384 = vmatpush1.msra.mxu0 0.0
        %385 = vmatprep.subr.mxu0 0.0
        %386 = vmatpush1.msra.mxu0 0.0
        %387 = vmatprep.mubr.f32.mxu0 0.0
        %v388 = vand.u32 %v296, 4294901760
        %v389 = vsub.f32 %v296, %v388
        %v390 = vand.u32 %v389, 4294901760
        %v391 = vsub.f32 %v389, %v390
        %v392 = vand.u32 %v391, 4294901760
        %393 = vmatmul.mubr.f32.gmra.mrb[0].mxu0 %v392
        %v394 = vpop.f32.mrb[0].mxu0
        %v395 = vadd.f32 0.0, %v394
        %v396 = vpop.f32.mrb[0].mxu0
        %v397 = vadd.f32 0.0, %v396
        %398 = vmatprep.mubr.f32.mxu0 0.0
        %v399 = vand.u32 %v299, 4294901760
        %v400 = vsub.f32 %v299, %v399
        %v401 = vand.u32 %v400, 4294901760
        %v402 = vsub.f32 %v400, %v401
        %v403 = vand.u32 %v402, 4294901760
        %404 = vmatmul.mubr.f32.gmra.mrb[0].mxu0 %v403
        %v405 = vpop.f32.mrb[0].mxu0
        %v406 = vadd.f32 0.0, %v405
        %v407 = vpop.f32.mrb[0].mxu0
        %v408 = vadd.f32 0.0, %v407
        %409 = vmatprep.mubr.f32.mxu0 0.0
        %v410 = vand.u32 %v302, 4294901760
        %v411 = vsub.f32 %v302, %v410
        %v412 = vand.u32 %v411, 4294901760
        %v413 = vsub.f32 %v411, %v412
        %v414 = vand.u32 %v413, 4294901760
        %415 = vmatmul.mubr.f32.gmra.mrb[0].mxu0 %v414
        %v416 = vpop.f32.mrb[0].mxu0
        %v417 = vadd.f32 0.0, %v416
        %v418 = vpop.f32.mrb[0].mxu0
        %v419 = vadd.f32 0.0, %v418
        %420 = vmatprep.mubr.f32.mxu0 0.0
        %v421 = vand.u32 %v305, 4294901760
        %v422 = vsub.f32 %v305, %v421
        %v423 = vand.u32 %v422, 4294901760
        %v424 = vsub.f32 %v422, %v423
        %v425 = vand.u32 %v424, 4294901760
        %426 = vmatmul.mubr.f32.gmra.mrb[0].mxu0 %v425
        %v427 = vpop.f32.mrb[0].mxu0
        %v428 = vadd.f32 0.0, %v427
        %v429 = vpop.f32.mrb[0].mxu0
        %v430 = vadd.f32 0.0, %v429
        %431 = vdwg.mxu0
        %v432 = vand.u32 %v275, 4294901760
        %v433 = vsub.f32 %v275, %v432
        %v434 = vand.u32 %v433, 4294901760
        %v435 = vsub.f32 %v433, %v434
        %v436 = vand.u32 %v435, 4294901760
        %437 = vmatprep.subr.mxu0 %v436
        %v438 = vand.u32 %v274, 4294901760
        %v439 = vsub.f32 %v274, %v438
        %v440 = vand.u32 %v439, 4294901760
        %v441 = vsub.f32 %v439, %v440
        %v442 = vand.u32 %v441, 4294901760
        %443 = vmatpush1.msra.mxu0 %v442
        %v444 = vand.u32 %v277, 4294901760
        %v445 = vsub.f32 %v277, %v444
        %v446 = vand.u32 %v445, 4294901760
        %v447 = vsub.f32 %v445, %v446
        %v448 = vand.u32 %v447, 4294901760
        %449 = vmatprep.subr.mxu0 %v448
        %v450 = vand.u32 %v276, 4294901760
        %v451 = vsub.f32 %v276, %v450
        %v452 = vand.u32 %v451, 4294901760
        %v453 = vsub.f32 %v451, %v452
        %v454 = vand.u32 %v453, 4294901760
        %455 = vmatpush1.msra.mxu0 %v454
        %v456 = vand.u32 %v279, 4294901760
        %v457 = vsub.f32 %v279, %v456
        %v458 = vand.u32 %v457, 4294901760
        %v459 = vsub.f32 %v457, %v458
        %v460 = vand.u32 %v459, 4294901760
        %461 = vmatprep.subr.mxu0 %v460
        %v462 = vand.u32 %v278, 4294901760
        %v463 = vsub.f32 %v278, %v462
        %v464 = vand.u32 %v463, 4294901760
        %v465 = vsub.f32 %v463, %v464
        %v466 = vand.u32 %v465, 4294901760
        %467 = vmatpush1.msra.mxu0 %v466
        %v468 = vand.u32 %v281, 4294901760
        %v469 = vsub.f32 %v281, %v468
        %v470 = vand.u32 %v469, 4294901760
        %v471 = vsub.f32 %v469, %v470
        %v472 = vand.u32 %v471, 4294901760
        %473 = vmatprep.subr.mxu0 %v472
        %v474 = vand.u32 %v280, 4294901760
        %v475 = vsub.f32 %v280, %v474
        %v476 = vand.u32 %v475, 4294901760
        %v477 = vsub.f32 %v475, %v476
        %v478 = vand.u32 %v477, 4294901760
        %479 = vmatpush1.msra.mxu0 %v478
        %v480 = vand.u32 %v283, 4294901760
        %v481 = vsub.f32 %v283, %v480
        %v482 = vand.u32 %v481, 4294901760
        %v483 = vsub.f32 %v481, %v482
        %v484 = vand.u32 %v483, 4294901760
        %485 = vmatprep.subr.mxu0 %v484
        %v486 = vand.u32 %v282, 4294901760
        %v487 = vsub.f32 %v282, %v486
        %v488 = vand.u32 %v487, 4294901760
        %v489 = vsub.f32 %v487, %v488
        %v490 = vand.u32 %v489, 4294901760
        %491 = vmatpush1.msra.mxu0 %v490
        %v492 = vand.u32 %v285, 4294901760
        %v493 = vsub.f32 %v285, %v492
        %v494 = vand.u32 %v493, 4294901760
        %v495 = vsub.f32 %v493, %v494
        %v496 = vand.u32 %v495, 4294901760
        %497 = vmatprep.subr.mxu0 %v496
        %v498 = vand.u32 %v284, 4294901760
        %v499 = vsub.f32 %v284, %v498
        %v500 = vand.u32 %v499, 4294901760
        %v501 = vsub.f32 %v499, %v500
        %v502 = vand.u32 %v501, 4294901760
        %503 = vmatpush1.msra.mxu0 %v502
        %v504 = vand.u32 %v287, 4294901760
        %v505 = vsub.f32 %v287, %v504
        %v506 = vand.u32 %v505, 4294901760
        %v507 = vsub.f32 %v505, %v506
        %v508 = vand.u32 %v507, 4294901760
        %509 = vmatprep.subr.mxu0 %v508
        %v510 = vand.u32 %v286, 4294901760
        %v511 = vsub.f32 %v286, %v510
        %v512 = vand.u32 %v511, 4294901760
        %v513 = vsub.f32 %v511, %v512
        %v514 = vand.u32 %v513, 4294901760
        %515 = vmatpush1.msra.mxu0 %v514
        %v516 = vand.u32 %v289, 4294901760
        %v517 = vsub.f32 %v289, %v516
        %v518 = vand.u32 %v517, 4294901760
        %v519 = vsub.f32 %v517, %v518
        %v520 = vand.u32 %v519, 4294901760
        %521 = vmatprep.subr.mxu0 %v520
        %v522 = vand.u32 %v288, 4294901760
        %v523 = vsub.f32 %v288, %v522
        %v524 = vand.u32 %v523, 4294901760
        %v525 = vsub.f32 %v523, %v524
        %v526 = vand.u32 %v525, 4294901760
        %527 = vmatpush1.msra.mxu0 %v526
        %528 = vmatprep.subr.mxu0 0.0
        %529 = vmatpush1.msra.mxu0 0.0
        %530 = vmatprep.subr.mxu0 0.0
        %531 = vmatpush1.msra.mxu0 0.0
        %532 = vmatprep.subr.mxu0 0.0
        %533 = vmatpush1.msra.mxu0 0.0
        %534 = vmatprep.subr.mxu0 0.0
        %535 = vmatpush1.msra.mxu0 0.0
        %536 = vmatprep.subr.mxu0 0.0
        %537 = vmatpush1.msra.mxu0 0.0
        %538 = vmatprep.subr.mxu0 0.0
        %539 = vmatpush1.msra.mxu0 0.0
        %540 = vmatprep.subr.mxu0 0.0
        %541 = vmatpush1.msra.mxu0 0.0
        %542 = vmatprep.subr.mxu0 0.0
        %543 = vmatpush1.msra.mxu0 0.0
        %544 = vmatprep.subr.mxu0 0.0
        %545 = vmatpush1.msra.mxu0 0.0
        %546 = vmatprep.subr.mxu0 0.0
        %547 = vmatpush1.msra.mxu0 0.0
        %548 = vmatprep.subr.mxu0 0.0
        %549 = vmatpush1.msra.mxu0 0.0
        %550 = vmatprep.subr.mxu0 0.0
        %551 = vmatpush1.msra.mxu0 0.0
        %552 = vmatprep.subr.mxu0 0.0
        %553 = vmatpush1.msra.mxu0 0.0
        %554 = vmatprep.subr.mxu0 0.0
        %555 = vmatpush1.msra.mxu0 0.0
        %556 = vmatprep.subr.mxu0 0.0
        %557 = vmatpush1.msra.mxu0 0.0
        %558 = vmatprep.subr.mxu0 0.0
        %559 = vmatpush1.msra.mxu0 0.0
        %560 = vmatprep.subr.mxu0 0.0
        %561 = vmatpush1.msra.mxu0 0.0
        %562 = vmatprep.subr.mxu0 0.0
        %563 = vmatpush1.msra.mxu0 0.0
        %564 = vmatprep.subr.mxu0 0.0
        %565 = vmatpush1.msra.mxu0 0.0
        %566 = vmatprep.subr.mxu0 0.0
        %567 = vmatpush1.msra.mxu0 0.0
        %568 = vmatprep.subr.mxu0 0.0
        %569 = vmatpush1.msra.mxu0 0.0
        %570 = vmatprep.subr.mxu0 0.0
        %571 = vmatpush1.msra.mxu0 0.0
        %572 = vmatprep.subr.mxu0 0.0
        %573 = vmatpush1.msra.mxu0 0.0
        %574 = vmatprep.subr.mxu0 0.0
        %575 = vmatpush1.msra.mxu0 0.0
        %576 = vmatprep.mubr.f32.mxu0 0.0
        %v577 = vand.u32 %v296, 4294901760
        %578 = vmatmul.mubr.f32.gmra.mrb[0].mxu0 %v577
        %v579 = vpop.f32.mrb[0].mxu0
        %v580 = vadd.f32 %v395, %v579
        %v581 = vpop.f32.mrb[0].mxu0
        %v582 = vadd.f32 %v397, %v581
        %583 = vmatprep.mubr.f32.mxu0 0.0
        %v584 = vand.u32 %v299, 4294901760
        %585 = vmatmul.mubr.f32.gmra.mrb[0].mxu0 %v584
        %v586 = vpop.f32.mrb[0].mxu0
        %v587 = vadd.f32 %v406, %v586
        %v588 = vpop.f32.mrb[0].mxu0
        %v589 = vadd.f32 %v408, %v588
        %590 = vmatprep.mubr.f32.mxu0 0.0
        %v591 = vand.u32 %v302, 4294901760
        %592 = vmatmul.mubr.f32.gmra.mrb[0].mxu0 %v591
        %v593 = vpop.f32.mrb[0].mxu0
        %v594 = vadd.f32 %v417, %v593
        %v595 = vpop.f32.mrb[0].mxu0
        %v596 = vadd.f32 %v419, %v595
        %597 = vmatprep.mubr.f32.mxu0 0.0
        %v598 = vand.u32 %v305, 4294901760
        %599 = vmatmul.mubr.f32.gmra.mrb[0].mxu0 %v598
        %v600 = vpop.f32.mrb[0].mxu0
        %v601 = vadd.f32 %v428, %v600
        %v602 = vpop.f32.mrb[0].mxu0
        %v603 = vadd.f32 %v430, %v602
        %604 = vdwg.mxu0
        %v605 = vand.u32 %v275, 4294901760
        %v606 = vsub.f32 %v275, %v605
        %607 = vmatprep.subr.mxu0 %v606
        %v608 = vand.u32 %v274, 4294901760
        %v609 = vsub.f32 %v274, %v608
        %610 = vmatpush1.msra.mxu0 %v609
        %v611 = vand.u32 %v277, 4294901760
        %v612 = vsub.f32 %v277, %v611
        %613 = vmatprep.subr.mxu0 %v612
        %v614 = vand.u32 %v276, 4294901760
        %v615 = vsub.f32 %v276, %v614
        %616 = vmatpush1.msra.mxu0 %v615
        %v617 = vand.u32 %v279, 4294901760
        %v618 = vsub.f32 %v279, %v617
        %619 = vmatprep.subr.mxu0 %v618
        %v620 = vand.u32 %v278, 4294901760
        %v621 = vsub.f32 %v278, %v620
        %622 = vmatpush1.msra.mxu0 %v621
        %v623 = vand.u32 %v281, 4294901760
        %v624 = vsub.f32 %v281, %v623
        %625 = vmatprep.subr.mxu0 %v624
        %v626 = vand.u32 %v280, 4294901760
        %v627 = vsub.f32 %v280, %v626
        %628 = vmatpush1.msra.mxu0 %v627
        %v629 = vand.u32 %v283, 4294901760
        %v630 = vsub.f32 %v283, %v629
        %631 = vmatprep.subr.mxu0 %v630
        %v632 = vand.u32 %v282, 4294901760
        %v633 = vsub.f32 %v282, %v632
        %634 = vmatpush1.msra.mxu0 %v633
        %v635 = vand.u32 %v285, 4294901760
        %v636 = vsub.f32 %v285, %v635
        %637 = vmatprep.subr.mxu0 %v636
        %v638 = vand.u32 %v284, 4294901760
        %v639 = vsub.f32 %v284, %v638
        %640 = vmatpush1.msra.mxu0 %v639
        %v641 = vand.u32 %v287, 4294901760
        %v642 = vsub.f32 %v287, %v641
        %643 = vmatprep.subr.mxu0 %v642
        %v644 = vand.u32 %v286, 4294901760
        %v645 = vsub.f32 %v286, %v644
        %646 = vmatpush1.msra.mxu0 %v645
        %v647 = vand.u32 %v289, 4294901760
        %v648 = vsub.f32 %v289, %v647
        %649 = vmatprep.subr.mxu0 %v648
        %v650 = vand.u32 %v288, 4294901760
        %v651 = vsub.f32 %v288, %v650
        %652 = vmatpush1.msra.mxu0 %v651
        %653 = vmatprep.subr.mxu0 0.0
        %654 = vmatpush1.msra.mxu0 0.0
        %655 = vmatprep.subr.mxu0 0.0
        %656 = vmatpush1.msra.mxu0 0.0
        %657 = vmatprep.subr.mxu0 0.0
        %658 = vmatpush1.msra.mxu0 0.0
        %659 = vmatprep.subr.mxu0 0.0
        %660 = vmatpush1.msra.mxu0 0.0
        %661 = vmatprep.subr.mxu0 0.0
        %662 = vmatpush1.msra.mxu0 0.0
        %663 = vmatprep.subr.mxu0 0.0
        %664 = vmatpush1.msra.mxu0 0.0
        %665 = vmatprep.subr.mxu0 0.0
        %666 = vmatpush1.msra.mxu0 0.0
        %667 = vmatprep.subr.mxu0 0.0
        %668 = vmatpush1.msra.mxu0 0.0
        %669 = vmatprep.subr.mxu0 0.0
        %670 = vmatpush1.msra.mxu0 0.0
        %671 = vmatprep.subr.mxu0 0.0
        %672 = vmatpush1.msra.mxu0 0.0
        %673 = vmatprep.subr.mxu0 0.0
        %674 = vmatpush1.msra.mxu0 0.0
        %675 = vmatprep.subr.mxu0 0.0
        %676 = vmatpush1.msra.mxu0 0.0
        %677 = vmatprep.subr.mxu0 0.0
        %678 = vmatpush1.msra.mxu0 0.0
        %679 = vmatprep.subr.mxu0 0.0
        %680 = vmatpush1.msra.mxu0 0.0
        %681 = vmatprep.subr.mxu0 0.0
        %682 = vmatpush1.msra.mxu0 0.0
        %683 = vmatprep.subr.mxu0 0.0
        %684 = vmatpush1.msra.mxu0 0.0
        %685 = vmatprep.subr.mxu0 0.0
        %686 = vmatpush1.msra.mxu0 0.0
        %687 = vmatprep.subr.mxu0 0.0
        %688 = vmatpush1.msra.mxu0 0.0
        %689 = vmatprep.subr.mxu0 0.0
        %690 = vmatpush1.msra.mxu0 0.0
        %691 = vmatprep.subr.mxu0 0.0
        %692 = vmatpush1.msra.mxu0 0.0
        %693 = vmatprep.subr.mxu0 0.0
        %694 = vmatpush1.msra.mxu0 0.0
        %695 = vmatprep.subr.mxu0 0.0
        %696 = vmatpush1.msra.mxu0 0.0
        %697 = vmatprep.subr.mxu0 0.0
        %698 = vmatpush1.msra.mxu0 0.0
        %699 = vmatprep.subr.mxu0 0.0
        %700 = vmatpush1.msra.mxu0 0.0
        %701 = vmatprep.mubr.f32.mxu0 0.0
        %v702 = vand.u32 %v296, 4294901760
        %v703 = vsub.f32 %v296, %v702
        %704 = vmatmul.mubr.f32.gmra.mrb[0].mxu0 %v703
        %v705 = vpop.f32.mrb[0].mxu0
        %v706 = vadd.f32 %v580, %v705
        %v707 = vpop.f32.mrb[0].mxu0
        %v708 = vadd.f32 %v582, %v707
        %709 = vmatprep.mubr.f32.mxu0 0.0
        %v710 = vand.u32 %v299, 4294901760
        %v711 = vsub.f32 %v299, %v710
        %712 = vmatmul.mubr.f32.gmra.mrb[0].mxu0 %v711
        %v713 = vpop.f32.mrb[0].mxu0
        %v714 = vadd.f32 %v587, %v713
        %v715 = vpop.f32.mrb[0].mxu0
        %v716 = vadd.f32 %v589, %v715
        %717 = vmatprep.mubr.f32.mxu0 0.0
        %v718 = vand.u32 %v302, 4294901760
        %v719 = vsub.f32 %v302, %v718
        %720 = vmatmul.mubr.f32.gmra.mrb[0].mxu0 %v719
        %v721 = vpop.f32.mrb[0].mxu0
        %v722 = vadd.f32 %v594, %v721
        %v723 = vpop.f32.mrb[0].mxu0
        %v724 = vadd.f32 %v596, %v723
        %725 = vmatprep.mubr.f32.mxu0 0.0
        %v726 = vand.u32 %v305, 4294901760
        %v727 = vsub.f32 %v305, %v726
        %728 = vmatmul.mubr.f32.gmra.mrb[0].mxu0 %v727
        %v729 = vpop.f32.mrb[0].mxu0
        %v730 = vadd.f32 %v601, %v729
        %v731 = vpop.f32.mrb[0].mxu0
        %v732 = vadd.f32 %v603, %v731
        %733 = vdwg.mxu0
        %v734 = vand.u32 %v275, 4294901760
        %735 = vmatprep.subr.mxu0 %v734
        %v736 = vand.u32 %v274, 4294901760
        %737 = vmatpush1.msra.mxu0 %v736
        %v738 = vand.u32 %v277, 4294901760
        %739 = vmatprep.subr.mxu0 %v738
        %v740 = vand.u32 %v276, 4294901760
        %741 = vmatpush1.msra.mxu0 %v740
        %v742 = vand.u32 %v279, 4294901760
        %743 = vmatprep.subr.mxu0 %v742
        %v744 = vand.u32 %v278, 4294901760
        %745 = vmatpush1.msra.mxu0 %v744
        %v746 = vand.u32 %v281, 4294901760
        %747 = vmatprep.subr.mxu0 %v746
        %v748 = vand.u32 %v280, 4294901760
        %749 = vmatpush1.msra.mxu0 %v748
        %v750 = vand.u32 %v283, 4294901760
        %751 = vmatprep.subr.mxu0 %v750
        %v752 = vand.u32 %v282, 4294901760
        %753 = vmatpush1.msra.mxu0 %v752
        %v754 = vand.u32 %v285, 4294901760
        %755 = vmatprep.subr.mxu0 %v754
        %v756 = vand.u32 %v284, 4294901760
        %757 = vmatpush1.msra.mxu0 %v756
        %v758 = vand.u32 %v287, 4294901760
        %759 = vmatprep.subr.mxu0 %v758
        %v760 = vand.u32 %v286, 4294901760
        %761 = vmatpush1.msra.mxu0 %v760
        %v762 = vand.u32 %v289, 4294901760
        %763 = vmatprep.subr.mxu0 %v762
        %v764 = vand.u32 %v288, 4294901760
        %765 = vmatpush1.msra.mxu0 %v764
        %766 = vmatprep.subr.mxu0 0.0
        %767 = vmatpush1.msra.mxu0 0.0
        %768 = vmatprep.subr.mxu0 0.0
        %769 = vmatpush1.msra.mxu0 0.0
        %770 = vmatprep.subr.mxu0 0.0
        %771 = vmatpush1.msra.mxu0 0.0
        %772 = vmatprep.subr.mxu0 0.0
        %773 = vmatpush1.msra.mxu0 0.0
        %774 = vmatprep.subr.mxu0 0.0
        %775 = vmatpush1.msra.mxu0 0.0
        %776 = vmatprep.subr.mxu0 0.0
        %777 = vmatpush1.msra.mxu0 0.0
        %778 = vmatprep.subr.mxu0 0.0
        %779 = vmatpush1.msra.mxu0 0.0
        %780 = vmatprep.subr.mxu0 0.0
        %781 = vmatpush1.msra.mxu0 0.0
        %782 = vmatprep.subr.mxu0 0.0
        %783 = vmatpush1.msra.mxu0 0.0
        %784 = vmatprep.subr.mxu0 0.0
        %785 = vmatpush1.msra.mxu0 0.0
        %786 = vmatprep.subr.mxu0 0.0
        %787 = vmatpush1.msra.mxu0 0.0
        %788 = vmatprep.subr.mxu0 0.0
        %789 = vmatpush1.msra.mxu0 0.0
        %790 = vmatprep.subr.mxu0 0.0
        %791 = vmatpush1.msra.mxu0 0.0
        %792 = vmatprep.subr.mxu0 0.0
        %793 = vmatpush1.msra.mxu0 0.0
        %794 = vmatprep.subr.mxu0 0.0
        %795 = vmatpush1.msra.mxu0 0.0
        %796 = vmatprep.subr.mxu0 0.0
        %797 = vmatpush1.msra.mxu0 0.0
        %798 = vmatprep.subr.mxu0 0.0
        %799 = vmatpush1.msra.mxu0 0.0
        %800 = vmatprep.subr.mxu0 0.0
        %801 = vmatpush1.msra.mxu0 0.0
        %802 = vmatprep.subr.mxu0 0.0
        %803 = vmatpush1.msra.mxu0 0.0
        %804 = vmatprep.subr.mxu0 0.0
        %805 = vmatpush1.msra.mxu0 0.0
        %806 = vmatprep.subr.mxu0 0.0
        %807 = vmatpush1.msra.mxu0 0.0
        %808 = vmatprep.subr.mxu0 0.0
        %809 = vmatpush1.msra.mxu0 0.0
        %810 = vmatprep.subr.mxu0 0.0
        %811 = vmatpush1.msra.mxu0 0.0
        %812 = vmatprep.subr.mxu0 0.0
        %813 = vmatpush1.msra.mxu0 0.0
        %814 = vmatprep.mubr.f32.mxu0 0.0
        %v815 = vand.u32 %v296, 4294901760
        %v816 = vsub.f32 %v296, %v815
        %v817 = vand.u32 %v816, 4294901760
        %818 = vmatmul.mubr.f32.gmra.mrb[0].mxu0 %v817
        %v819 = vpop.f32.mrb[0].mxu0
        %v820 = vadd.f32 %v706, %v819
        %v821 = vpop.f32.mrb[0].mxu0
        %v822 = vadd.f32 %v708, %v821
        %823 = vmatprep.mubr.f32.mxu0 0.0
        %v824 = vand.u32 %v299, 4294901760
        %v825 = vsub.f32 %v299, %v824
        %v826 = vand.u32 %v825, 4294901760
        %827 = vmatmul.mubr.f32.gmra.mrb[0].mxu0 %v826
        %v828 = vpop.f32.mrb[0].mxu0
        %v829 = vadd.f32 %v714, %v828
        %v830 = vpop.f32.mrb[0].mxu0
        %v831 = vadd.f32 %v716, %v830
        %832 = vmatprep.mubr.f32.mxu0 0.0
        %v833 = vand.u32 %v302, 4294901760
        %v834 = vsub.f32 %v302, %v833
        %v835 = vand.u32 %v834, 4294901760
        %836 = vmatmul.mubr.f32.gmra.mrb[0].mxu0 %v835
        %v837 = vpop.f32.mrb[0].mxu0
        %v838 = vadd.f32 %v722, %v837
        %v839 = vpop.f32.mrb[0].mxu0
        %v840 = vadd.f32 %v724, %v839
        %841 = vmatprep.mubr.f32.mxu0 0.0
        %v842 = vand.u32 %v305, 4294901760
        %v843 = vsub.f32 %v305, %v842
        %v844 = vand.u32 %v843, 4294901760
        %845 = vmatmul.mubr.f32.gmra.mrb[0].mxu0 %v844
        %v846 = vpop.f32.mrb[0].mxu0
        %v847 = vadd.f32 %v730, %v846
        %v848 = vpop.f32.mrb[0].mxu0
        %v849 = vadd.f32 %v732, %v848
        %850 = vdwg.mxu0
        %v851 = vand.u32 %v275, 4294901760
        %v852 = vsub.f32 %v275, %v851
        %v853 = vand.u32 %v852, 4294901760
        %854 = vmatprep.subr.mxu0 %v853
        %v855 = vand.u32 %v274, 4294901760
        %v856 = vsub.f32 %v274, %v855
        %v857 = vand.u32 %v856, 4294901760
        %858 = vmatpush1.msra.mxu0 %v857
        %v859 = vand.u32 %v277, 4294901760
        %v860 = vsub.f32 %v277, %v859
        %v861 = vand.u32 %v860, 4294901760
        %862 = vmatprep.subr.mxu0 %v861
        %v863 = vand.u32 %v276, 4294901760
        %v864 = vsub.f32 %v276, %v863
        %v865 = vand.u32 %v864, 4294901760
        %866 = vmatpush1.msra.mxu0 %v865
        %v867 = vand.u32 %v279, 4294901760
        %v868 = vsub.f32 %v279, %v867
        %v869 = vand.u32 %v868, 4294901760
        %870 = vmatprep.subr.mxu0 %v869
        %v871 = vand.u32 %v278, 4294901760
        %v872 = vsub.f32 %v278, %v871
        %v873 = vand.u32 %v872, 4294901760
        %874 = vmatpush1.msra.mxu0 %v873
        %v875 = vand.u32 %v281, 4294901760
        %v876 = vsub.f32 %v281, %v875
        %v877 = vand.u32 %v876, 4294901760
        %878 = vmatprep.subr.mxu0 %v877
        %v879 = vand.u32 %v280, 4294901760
        %v880 = vsub.f32 %v280, %v879
        %v881 = vand.u32 %v880, 4294901760
        %882 = vmatpush1.msra.mxu0 %v881
        %v883 = vand.u32 %v283, 4294901760
        %v884 = vsub.f32 %v283, %v883
        %v885 = vand.u32 %v884, 4294901760
        %886 = vmatprep.subr.mxu0 %v885
        %v887 = vand.u32 %v282, 4294901760
        %v888 = vsub.f32 %v282, %v887
        %v889 = vand.u32 %v888, 4294901760
        %890 = vmatpush1.msra.mxu0 %v889
        %v891 = vand.u32 %v285, 4294901760
        %v892 = vsub.f32 %v285, %v891
        %v893 = vand.u32 %v892, 4294901760
        %894 = vmatprep.subr.mxu0 %v893
        %v895 = vand.u32 %v284, 4294901760
        %v896 = vsub.f32 %v284, %v895
        %v897 = vand.u32 %v896, 4294901760
        %898 = vmatpush1.msra.mxu0 %v897
        %v899 = vand.u32 %v287, 4294901760
        %v900 = vsub.f32 %v287, %v899
        %v901 = vand.u32 %v900, 4294901760
        %902 = vmatprep.subr.mxu0 %v901
        %v903 = vand.u32 %v286, 4294901760
        %v904 = vsub.f32 %v286, %v903
        %v905 = vand.u32 %v904, 4294901760
        %906 = vmatpush1.msra.mxu0 %v905
        %v907 = vand.u32 %v289, 4294901760
        %v908 = vsub.f32 %v289, %v907
        %v909 = vand.u32 %v908, 4294901760
        %910 = vmatprep.subr.mxu0 %v909
        %v911 = vand.u32 %v288, 4294901760
        %v912 = vsub.f32 %v288, %v911
        %v913 = vand.u32 %v912, 4294901760
        %914 = vmatpush1.msra.mxu0 %v913
        %915 = vmatprep.subr.mxu0 0.0
        %916 = vmatpush1.msra.mxu0 0.0
        %917 = vmatprep.subr.mxu0 0.0
        %918 = vmatpush1.msra.mxu0 0.0
        %919 = vmatprep.subr.mxu0 0.0
        %920 = vmatpush1.msra.mxu0 0.0
        %921 = vmatprep.subr.mxu0 0.0
        %922 = vmatpush1.msra.mxu0 0.0
        %923 = vmatprep.subr.mxu0 0.0
        %924 = vmatpush1.msra.mxu0 0.0
        %925 = vmatprep.subr.mxu0 0.0
        %926 = vmatpush1.msra.mxu0 0.0
        %927 = vmatprep.subr.mxu0 0.0
        %928 = vmatpush1.msra.mxu0 0.0
        %929 = vmatprep.subr.mxu0 0.0
        %930 = vmatpush1.msra.mxu0 0.0
        %931 = vmatprep.subr.mxu0 0.0
        %932 = vmatpush1.msra.mxu0 0.0
        %933 = vmatprep.subr.mxu0 0.0
        %934 = vmatpush1.msra.mxu0 0.0
        %935 = vmatprep.subr.mxu0 0.0
        %936 = vmatpush1.msra.mxu0 0.0
        %937 = vmatprep.subr.mxu0 0.0
        %938 = vmatpush1.msra.mxu0 0.0
        %939 = vmatprep.subr.mxu0 0.0
        %940 = vmatpush1.msra.mxu0 0.0
        %941 = vmatprep.subr.mxu0 0.0
        %942 = vmatpush1.msra.mxu0 0.0
        %943 = vmatprep.subr.mxu0 0.0
        %944 = vmatpush1.msra.mxu0 0.0
        %945 = vmatprep.subr.mxu0 0.0
        %946 = vmatpush1.msra.mxu0 0.0
        %947 = vmatprep.subr.mxu0 0.0
        %948 = vmatpush1.msra.mxu0 0.0
        %949 = vmatprep.subr.mxu0 0.0
        %950 = vmatpush1.msra.mxu0 0.0
        %951 = vmatprep.subr.mxu0 0.0
        %952 = vmatpush1.msra.mxu0 0.0
        %953 = vmatprep.subr.mxu0 0.0
        %954 = vmatpush1.msra.mxu0 0.0
        %955 = vmatprep.subr.mxu0 0.0
        %956 = vmatpush1.msra.mxu0 0.0
        %957 = vmatprep.subr.mxu0 0.0
        %958 = vmatpush1.msra.mxu0 0.0
        %959 = vmatprep.subr.mxu0 0.0
        %960 = vmatpush1.msra.mxu0 0.0
        %961 = vmatprep.subr.mxu0 0.0
        %962 = vmatpush1.msra.mxu0 0.0
        %963 = vmatprep.mubr.f32.mxu0 0.0
        %v964 = vand.u32 %v296, 4294901760
        %965 = vmatmul.mubr.f32.gmra.mrb[0].mxu0 %v964
        %v966 = vpop.f32.mrb[0].mxu0
        %v967 = vadd.f32 %v820, %v966
        %v968 = vpop.f32.mrb[0].mxu0
        %v969 = vadd.f32 %v822, %v968
        %970 = vmatprep.mubr.f32.mxu0 0.0
        %v971 = vand.u32 %v299, 4294901760
        %972 = vmatmul.mubr.f32.gmra.mrb[0].mxu0 %v971
        %v973 = vpop.f32.mrb[0].mxu0
        %v974 = vadd.f32 %v829, %v973
        %v975 = vpop.f32.mrb[0].mxu0
        %v976 = vadd.f32 %v831, %v975
        %977 = vmatprep.mubr.f32.mxu0 0.0
        %v978 = vand.u32 %v302, 4294901760
        %979 = vmatmul.mubr.f32.gmra.mrb[0].mxu0 %v978
        %v980 = vpop.f32.mrb[0].mxu0
        %v981 = vadd.f32 %v838, %v980
        %v982 = vpop.f32.mrb[0].mxu0
        %v983 = vadd.f32 %v840, %v982
        %984 = vmatprep.mubr.f32.mxu0 0.0
        %v985 = vand.u32 %v305, 4294901760
        %986 = vmatmul.mubr.f32.gmra.mrb[0].mxu0 %v985
        %v987 = vpop.f32.mrb[0].mxu0
        %v988 = vadd.f32 %v847, %v987
        %v989 = vpop.f32.mrb[0].mxu0
        %v990 = vadd.f32 %v849, %v989
        %991 = vdwg.mxu0
        %v992 = vand.u32 %v275, 4294901760
        %993 = vmatprep.subr.mxu0 %v992
        %v994 = vand.u32 %v274, 4294901760
        %995 = vmatpush1.msra.mxu0 %v994
        %v996 = vand.u32 %v277, 4294901760
        %997 = vmatprep.subr.mxu0 %v996
        %v998 = vand.u32 %v276, 4294901760
        %999 = vmatpush1.msra.mxu0 %v998
        %v1000 = vand.u32 %v279, 4294901760
        %1001 = vmatprep.subr.mxu0 %v1000
        %v1002 = vand.u32 %v278, 4294901760
        %1003 = vmatpush1.msra.mxu0 %v1002
        %v1004 = vand.u32 %v281, 4294901760
        %1005 = vmatprep.subr.mxu0 %v1004
        %v1006 = vand.u32 %v280, 4294901760
        %1007 = vmatpush1.msra.mxu0 %v1006
        %v1008 = vand.u32 %v283, 4294901760
        %1009 = vmatprep.subr.mxu0 %v1008
        %v1010 = vand.u32 %v282, 4294901760
        %1011 = vmatpush1.msra.mxu0 %v1010
        %v1012 = vand.u32 %v285, 4294901760
        %1013 = vmatprep.subr.mxu0 %v1012
        %v1014 = vand.u32 %v284, 4294901760
        %1015 = vmatpush1.msra.mxu0 %v1014
        %v1016 = vand.u32 %v287, 4294901760
        %1017 = vmatprep.subr.mxu0 %v1016
        %v1018 = vand.u32 %v286, 4294901760
        %1019 = vmatpush1.msra.mxu0 %v1018
        %v1020 = vand.u32 %v289, 4294901760
        %1021 = vmatprep.subr.mxu0 %v1020
        %v1022 = vand.u32 %v288, 4294901760
        %1023 = vmatpush1.msra.mxu0 %v1022
        %1024 = vmatprep.subr.mxu0 0.0
        %1025 = vmatpush1.msra.mxu0 0.0
        %1026 = vmatprep.subr.mxu0 0.0
        %1027 = vmatpush1.msra.mxu0 0.0
        %1028 = vmatprep.subr.mxu0 0.0
        %1029 = vmatpush1.msra.mxu0 0.0
        %1030 = vmatprep.subr.mxu0 0.0
        %1031 = vmatpush1.msra.mxu0 0.0
        %1032 = vmatprep.subr.mxu0 0.0
        %1033 = vmatpush1.msra.mxu0 0.0
        %1034 = vmatprep.subr.mxu0 0.0
        %1035 = vmatpush1.msra.mxu0 0.0
        %1036 = vmatprep.subr.mxu0 0.0
        %1037 = vmatpush1.msra.mxu0 0.0
        %1038 = vmatprep.subr.mxu0 0.0
        %1039 = vmatpush1.msra.mxu0 0.0
        %1040 = vmatprep.subr.mxu0 0.0
        %1041 = vmatpush1.msra.mxu0 0.0
        %1042 = vmatprep.subr.mxu0 0.0
        %1043 = vmatpush1.msra.mxu0 0.0
        %1044 = vmatprep.subr.mxu0 0.0
        %1045 = vmatpush1.msra.mxu0 0.0
        %1046 = vmatprep.subr.mxu0 0.0
        %1047 = vmatpush1.msra.mxu0 0.0
        %1048 = vmatprep.subr.mxu0 0.0
        %1049 = vmatpush1.msra.mxu0 0.0
        %1050 = vmatprep.subr.mxu0 0.0
        %1051 = vmatpush1.msra.mxu0 0.0
        %1052 = vmatprep.subr.mxu0 0.0
        %1053 = vmatpush1.msra.mxu0 0.0
        %1054 = vmatprep.subr.mxu0 0.0
        %1055 = vmatpush1.msra.mxu0 0.0
        %1056 = vmatprep.subr.mxu0 0.0
        %1057 = vmatpush1.msra.mxu0 0.0
        %1058 = vmatprep.subr.mxu0 0.0
        %1059 = vmatpush1.msra.mxu0 0.0
        %1060 = vmatprep.subr.mxu0 0.0
        %1061 = vmatpush1.msra.mxu0 0.0
        %1062 = vmatprep.subr.mxu0 0.0
        %1063 = vmatpush1.msra.mxu0 0.0
        %1064 = vmatprep.subr.mxu0 0.0
        %1065 = vmatpush1.msra.mxu0 0.0
        %1066 = vmatprep.subr.mxu0 0.0
        %1067 = vmatpush1.msra.mxu0 0.0
        %1068 = vmatprep.subr.mxu0 0.0
        %1069 = vmatpush1.msra.mxu0 0.0
        %1070 = vmatprep.subr.mxu0 0.0
        %1071 = vmatpush1.msra.mxu0 0.0
        %1072 = vmatprep.mubr.f32.mxu0 0.0
        %v1073 = vand.u32 %v296, 4294901760
        %1074 = vmatmul.mubr.f32.gmra.mrb[0].mxu0 %v1073
        %v1075 = vpop.f32.mrb[0].mxu0
        %v1076 = vadd.f32 %v967, %v1075
        %v1077 = vpop.f32.mrb[0].mxu0
        %v1078 = vadd.f32 %v969, %v1077
        %1079 = vmatprep.mubr.f32.mxu0 0.0
        %v1080 = vand.u32 %v299, 4294901760
        %1081 = vmatmul.mubr.f32.gmra.mrb[0].mxu0 %v1080
        %v1082 = vpop.f32.mrb[0].mxu0
        %v1083 = vadd.f32 %v974, %v1082
        %v1084 = vpop.f32.mrb[0].mxu0
        %v1085 = vadd.f32 %v976, %v1084
        %1086 = vmatprep.mubr.f32.mxu0 0.0
        %v1087 = vand.u32 %v302, 4294901760
        %1088 = vmatmul.mubr.f32.gmra.mrb[0].mxu0 %v1087
        %v1089 = vpop.f32.mrb[0].mxu0
        %v1090 = vadd.f32 %v981, %v1089
        %v1091 = vpop.f32.mrb[0].mxu0
        %v1092 = vadd.f32 %v983, %v1091
        %1093 = vmatprep.mubr.f32.mxu0 0.0
        %v1094 = vand.u32 %v305, 4294901760
        %1095 = vmatmul.mubr.f32.gmra.mrb[0].mxu0 %v1094
        %v1096 = vpop.f32.mrb[0].mxu0
        %v1097 = vadd.f32 %v988, %v1096
        %v1098 = vpop.f32.mrb[0].mxu0
        %v1099 = vadd.f32 %v990, %v1098
        %1100 = vdwg.mxu0
        %s1101 = smul.u32 %s29, 32
        %s1102 = sld [smem:[#allocation6 + %s1101]]
        %v1103 = vstv %s1102
        %v1104 = vmul.f32 %v1103, %v1076
        %v1105 = vmul.f32 %v1103, %v1078
        %s1106 = sadd.s32 %s1101, 1
        %s1107 = sld [smem:[#allocation6 + %s1106]]
        %v1108 = vstv %s1107
        %v1109 = vmul.f32 %v1108, %v1083
        %v1110 = vmul.f32 %v1108, %v1085
        %v1111 = vadd.f32 %v1104, %v1109
        %v1112 = vadd.f32 %v1105, %v1110
        %s1113 = sadd.s32 %s1101, 2
        %s1114 = sld [smem:[#allocation6 + %s1113]]
        %v1115 = vstv %s1114
        %v1116 = vmul.f32 %v1115, %v1090
        %v1117 = vmul.f32 %v1115, %v1092
        %v1118 = vadd.f32 %v1111, %v1116
        %v1119 = vadd.f32 %v1112, %v1117
        %s1120 = sadd.s32 %s1101, 3
        %s1121 = sld [smem:[#allocation6 + %s1120]]
        %v1122 = vstv %s1121
        %v1123 = vmul.f32 %v1122, %v1097
        %v1124 = vmul.f32 %v1122, %v1099
        %v1125 = vadd.f32 %v1118, %v1123
        %v1126 = vadd.f32 %v1119, %v1124
        %s1127 = sld [smem:[#allocation7 + %s273]]
        %v1128 = vstv %s1127
        %v1129 = vadd.f32 %v1125, %v1128
        %v1130 = vadd.f32 %v1126, %v1128
        %s1131 = sadd.s32 %s273, 1
        %s1132 = smul.u32 %s1131, 4
        %s1133 = sld [smem:[#allocation6 + %s1132]]
        %v1134 = vstv %s1133
        %v1135 = vmul.f32 %v1134, %v1076
        %v1136 = vmul.f32 %v1134, %v1078
        %s1137 = sadd.s32 %s1132, 1
        %s1138 = sld [smem:[#allocation6 + %s1137]]
        %v1139 = vstv %s1138
        %v1140 = vmul.f32 %v1139, %v1083
        %v1141 = vmul.f32 %v1139, %v1085
        %v1142 = vadd.f32 %v1135, %v1140
        %v1143 = vadd.f32 %v1136, %v1141
        %s1144 = sadd.s32 %s1132, 2
        %s1145 = sld [smem:[#allocation6 + %s1144]]
        %v1146 = vstv %s1145
        %v1147 = vmul.f32 %v1146, %v1090
        %v1148 = vmul.f32 %v1146, %v1092
        %v1149 = vadd.f32 %v1142, %v1147
        %v1150 = vadd.f32 %v1143, %v1148
        %s1151 = sadd.s32 %s1132, 3
        %s1152 = sld [smem:[#allocation6 + %s1151]]
        %v1153 = vstv %s1152
        %v1154 = vmul.f32 %v1153, %v1097
        %v1155 = vmul.f32 %v1153, %v1099
        %v1156 = vadd.f32 %v1149, %v1154
        %v1157 = vadd.f32 %v1150, %v1155
        %s1158 = sld [smem:[#allocation7 + %s1131]]
        %v1159 = vstv %s1158
        %v1160 = vadd.f32 %v1156, %v1159
        %v1161 = vadd.f32 %v1157, %v1159
        %s1162 = sadd.s32 %s273, 2
        %s1163 = smul.u32 %s1162, 4
        %s1164 = sld [smem:[#allocation6 + %s1163]]
        %v1165 = vstv %s1164
        %v1166 = vmul.f32 %v1165, %v1076
        %v1167 = vmul.f32 %v1165, %v1078
        %s1168 = sadd.s32 %s1163, 1
        %s1169 = sld [smem:[#allocation6 + %s1168]]
        %v1170 = vstv %s1169
        %v1171 = vmul.f32 %v1170, %v1083
        %v1172 = vmul.f32 %v1170, %v1085
        %v1173 = vadd.f32 %v1166, %v1171
        %v1174 = vadd.f32 %v1167, %v1172
        %s1175 = sadd.s32 %s1163, 2
        %s1176 = sld [smem:[#allocation6 + %s1175]]
        %v1177 = vstv %s1176
        %v1178 = vmul.f32 %v1177, %v1090
        %v1179 = vmul.f32 %v1177, %v1092
        %v1180 = vadd.f32 %v1173, %v1178
        %v1181 = vadd.f32 %v1174, %v1179
        %s1182 = sadd.s32 %s1163, 3
        %s1183 = sld [smem:[#allocation6 + %s1182]]
        %v1184 = vstv %s1183
        %v1185 = vmul.f32 %v1184, %v1097
        %v1186 = vmul.f32 %v1184, %v1099
        %v1187 = vadd.f32 %v1180, %v1185
        %v1188 = vadd.f32 %v1181, %v1186
        %s1189 = sld [smem:[#allocation7 + %s1162]]
        %v1190 = vstv %s1189
        %v1191 = vadd.f32 %v1187, %v1190
        %v1192 = vadd.f32 %v1188, %v1190
        %s1193 = sadd.s32 %s273, 3
        %s1194 = smul.u32 %s1193, 4
        %s1195 = sld [smem:[#allocation6 + %s1194]]
        %v1196 = vstv %s1195
        %v1197 = vmul.f32 %v1196, %v1076
        %v1198 = vmul.f32 %v1196, %v1078
        %s1199 = sadd.s32 %s1194, 1
        %s1200 = sld [smem:[#allocation6 + %s1199]]
        %v1201 = vstv %s1200
        %v1202 = vmul.f32 %v1201, %v1083
        %v1203 = vmul.f32 %v1201, %v1085
        %v1204 = vadd.f32 %v1197, %v1202
        %v1205 = vadd.f32 %v1198, %v1203
        %s1206 = sadd.s32 %s1194, 2
        %s1207 = sld [smem:[#allocation6 + %s1206]]
        %v1208 = vstv %s1207
        %v1209 = vmul.f32 %v1208, %v1090
        %v1210 = vmul.f32 %v1208, %v1092
        %v1211 = vadd.f32 %v1204, %v1209
        %v1212 = vadd.f32 %v1205, %v1210
        %s1213 = sadd.s32 %s1194, 3
        %s1214 = sld [smem:[#allocation6 + %s1213]]
        %v1215 = vstv %s1214
        %v1216 = vmul.f32 %v1215, %v1097
        %v1217 = vmul.f32 %v1215, %v1099
        %v1218 = vadd.f32 %v1211, %v1216
        %v1219 = vadd.f32 %v1212, %v1217
        %s1220 = sld [smem:[#allocation7 + %s1193]]
        %v1221 = vstv %s1220
        %v1222 = vadd.f32 %v1218, %v1221
        %v1223 = vadd.f32 %v1219, %v1221
        %s1224 = sadd.s32 %s273, 4
        %s1225 = smul.u32 %s1224, 4
        %s1226 = sld [smem:[#allocation6 + %s1225]]
        %v1227 = vstv %s1226
        %v1228 = vmul.f32 %v1227, %v1076
        %v1229 = vmul.f32 %v1227, %v1078
        %s1230 = sadd.s32 %s1225, 1
        %s1231 = sld [smem:[#allocation6 + %s1230]]
        %v1232 = vstv %s1231
        %v1233 = vmul.f32 %v1232, %v1083
        %v1234 = vmul.f32 %v1232, %v1085
        %v1235 = vadd.f32 %v1228, %v1233
        %v1236 = vadd.f32 %v1229, %v1234
        %s1237 = sadd.s32 %s1225, 2
        %s1238 = sld [smem:[#allocation6 + %s1237]]
        %v1239 = vstv %s1238
        %v1240 = vmul.f32 %v1239, %v1090
        %v1241 = vmul.f32 %v1239, %v1092
        %v1242 = vadd.f32 %v1235, %v1240
        %v1243 = vadd.f32 %v1236, %v1241
        %s1244 = sadd.s32 %s1225, 3
        %s1245 = sld [smem:[#allocation6 + %s1244]]
        %v1246 = vstv %s1245
        %v1247 = vmul.f32 %v1246, %v1097
        %v1248 = vmul.f32 %v1246, %v1099
        %v1249 = vadd.f32 %v1242, %v1247
        %v1250 = vadd.f32 %v1243, %v1248
        %s1251 = sld [smem:[#allocation7 + %s1224]]
        %v1252 = vstv %s1251
        %v1253 = vadd.f32 %v1249, %v1252
        %v1254 = vadd.f32 %v1250, %v1252
        %s1255 = sadd.s32 %s273, 5
        %s1256 = smul.u32 %s1255, 4
        %s1257 = sld [smem:[#allocation6 + %s1256]]
        %v1258 = vstv %s1257
        %v1259 = vmul.f32 %v1258, %v1076
        %v1260 = vmul.f32 %v1258, %v1078
        %s1261 = sadd.s32 %s1256, 1
        %s1262 = sld [smem:[#allocation6 + %s1261]]
        %v1263 = vstv %s1262
        %v1264 = vmul.f32 %v1263, %v1083
        %v1265 = vmul.f32 %v1263, %v1085
        %v1266 = vadd.f32 %v1259, %v1264
        %v1267 = vadd.f32 %v1260, %v1265
        %s1268 = sadd.s32 %s1256, 2
        %s1269 = sld [smem:[#allocation6 + %s1268]]
        %v1270 = vstv %s1269
        %v1271 = vmul.f32 %v1270, %v1090
        %v1272 = vmul.f32 %v1270, %v1092
        %v1273 = vadd.f32 %v1266, %v1271
        %v1274 = vadd.f32 %v1267, %v1272
        %s1275 = sadd.s32 %s1256, 3
        %s1276 = sld [smem:[#allocation6 + %s1275]]
        %v1277 = vstv %s1276
        %v1278 = vmul.f32 %v1277, %v1097
        %v1279 = vmul.f32 %v1277, %v1099
        %v1280 = vadd.f32 %v1273, %v1278
        %v1281 = vadd.f32 %v1274, %v1279
        %s1282 = sld [smem:[#allocation7 + %s1255]]
        %v1283 = vstv %s1282
        %v1284 = vadd.f32 %v1280, %v1283
        %v1285 = vadd.f32 %v1281, %v1283
        %s1286 = sadd.s32 %s273, 6
        %s1287 = smul.u32 %s1286, 4
        %s1288 = sld [smem:[#allocation6 + %s1287]]
        %v1289 = vstv %s1288
        %v1290 = vmul.f32 %v1289, %v1076
        %v1291 = vmul.f32 %v1289, %v1078
        %s1292 = sadd.s32 %s1287, 1
        %s1293 = sld [smem:[#allocation6 + %s1292]]
        %v1294 = vstv %s1293
        %v1295 = vmul.f32 %v1294, %v1083
        %v1296 = vmul.f32 %v1294, %v1085
        %v1297 = vadd.f32 %v1290, %v1295
        %v1298 = vadd.f32 %v1291, %v1296
        %s1299 = sadd.s32 %s1287, 2
        %s1300 = sld [smem:[#allocation6 + %s1299]]
        %v1301 = vstv %s1300
        %v1302 = vmul.f32 %v1301, %v1090
        %v1303 = vmul.f32 %v1301, %v1092
        %v1304 = vadd.f32 %v1297, %v1302
        %v1305 = vadd.f32 %v1298, %v1303
        %s1306 = sadd.s32 %s1287, 3
        %s1307 = sld [smem:[#allocation6 + %s1306]]
        %v1308 = vstv %s1307
        %v1309 = vmul.f32 %v1308, %v1097
        %v1310 = vmul.f32 %v1308, %v1099
        %v1311 = vadd.f32 %v1304, %v1309
        %v1312 = vadd.f32 %v1305, %v1310
        %s1313 = sld [smem:[#allocation7 + %s1286]]
        %v1314 = vstv %s1313
        %v1315 = vadd.f32 %v1311, %v1314
        %v1316 = vadd.f32 %v1312, %v1314
        %s1317 = sadd.s32 %s273, 7
        %s1318 = smul.u32 %s1317, 4
        %s1319 = sld [smem:[#allocation6 + %s1318]]
        %v1320 = vstv %s1319
        %v1321 = vmul.f32 %v1320, %v1076
        %v1322 = vmul.f32 %v1320, %v1078
        %s1323 = sadd.s32 %s1318, 1
        %s1324 = sld [smem:[#allocation6 + %s1323]]
        %v1325 = vstv %s1324
        %v1326 = vmul.f32 %v1325, %v1083
        %v1327 = vmul.f32 %v1325, %v1085
        %v1328 = vadd.f32 %v1321, %v1326
        %v1329 = vadd.f32 %v1322, %v1327
        %s1330 = sadd.s32 %s1318, 2
        %s1331 = sld [smem:[#allocation6 + %s1330]]
        %v1332 = vstv %s1331
        %v1333 = vmul.f32 %v1332, %v1090
        %v1334 = vmul.f32 %v1332, %v1092
        %v1335 = vadd.f32 %v1328, %v1333
        %v1336 = vadd.f32 %v1329, %v1334
        %s1337 = sadd.s32 %s1318, 3
        %s1338 = sld [smem:[#allocation6 + %s1337]]
        %v1339 = vstv %s1338
        %v1340 = vmul.f32 %v1339, %v1097
        %v1341 = vmul.f32 %v1339, %v1099
        %v1342 = vadd.f32 %v1335, %v1340
        %v1343 = vadd.f32 %v1336, %v1341
        %s1344 = sld [smem:[#allocation7 + %s1317]]
        %v1345 = vstv %s1344
        %v1346 = vadd.f32 %v1342, %v1345
        %v1347 = vadd.f32 %v1343, %v1345
        %v1364 = vrot.slane %v1129, 7
        %v1365 = vrot.slane %v1130, 7
        %v1366 = vrot.slane %v1160, 7
        %v1367 = vrot.slane %v1161, 7
        %v1368 = vrot.slane %v1191, 7
        %v1369 = vrot.slane %v1192, 7
        %v1370 = vrot.slane %v1222, 7
        %v1371 = vrot.slane %v1223, 7
        %v1372 = vrot.slane %v1253, 7
        %v1373 = vrot.slane %v1254, 7
        %v1374 = vrot.slane %v1284, 7
        %v1375 = vrot.slane %v1285, 7
        %v1376 = vrot.slane %v1315, 7
        %v1377 = vrot.slane %v1316, 7
        %v1378 = vrot.slane %v1346, 7
        %v1379 = vrot.slane %v1347, 7
        %vm1396 = vcmask 1040384
        %v1397 = vsel %vm1396, %v1129, %v1364
        %v1398 = vsel %vm1396, %v1130, %v1365
        %v1399 = vsel %vm1396, %v1160, %v1366
        %v1400 = vsel %vm1396, %v1161, %v1367
        %v1401 = vsel %vm1396, %v1191, %v1368
        %v1402 = vsel %vm1396, %v1192, %v1369
        %v1403 = vsel %vm1396, %v1222, %v1370
        %v1404 = vsel %vm1396, %v1223, %v1371
        %v1405 = vsel %vm1396, %v1253, %v1372
        %v1406 = vsel %vm1396, %v1254, %v1373
        %v1407 = vsel %vm1396, %v1284, %v1374
        %v1408 = vsel %vm1396, %v1285, %v1375
        %v1409 = vsel %vm1396, %v1315, %v1376
        %v1410 = vsel %vm1396, %v1316, %v1377
        %v1411 = vsel %vm1396, %v1346, %v1378
        %v1412 = vsel %vm1396, %v1347, %v1379
        %v1413 = vrot.slane %v1129, 1
        %v1414 = vrot.slane %v1130, 1
        %v1415 = vrot.slane %v1160, 1
        %v1416 = vrot.slane %v1161, 1
        %v1417 = vrot.slane %v1191, 1
        %v1418 = vrot.slane %v1192, 1
        %v1419 = vrot.slane %v1222, 1
        %v1420 = vrot.slane %v1223, 1
        %v1421 = vrot.slane %v1253, 1
        %v1422 = vrot.slane %v1254, 1
        %v1423 = vrot.slane %v1284, 1
        %v1424 = vrot.slane %v1285, 1
        %v1425 = vrot.slane %v1315, 1
        %v1426 = vrot.slane %v1316, 1
        %v1427 = vrot.slane %v1346, 1
        %v1428 = vrot.slane %v1347, 1
        %vm1445 = vcmask 1046528
        %v1446 = vsel %vm1445, %v1413, %v1129
        %v1447 = vsel %vm1445, %v1414, %v1130
        %v1448 = vsel %vm1445, %v1415, %v1160
        %v1449 = vsel %vm1445, %v1416, %v1161
        %v1450 = vsel %vm1445, %v1417, %v1191
        %v1451 = vsel %vm1445, %v1418, %v1192
        %v1452 = vsel %vm1445, %v1419, %v1222
        %v1453 = vsel %vm1445, %v1420, %v1223
        %v1454 = vsel %vm1445, %v1421, %v1253
        %v1455 = vsel %vm1445, %v1422, %v1254
        %v1456 = vsel %vm1445, %v1423, %v1284
        %v1457 = vsel %vm1445, %v1424, %v1285
        %v1458 = vsel %vm1445, %v1425, %v1315
        %v1459 = vsel %vm1445, %v1426, %v1316
        %v1460 = vsel %vm1445, %v1427, %v1346
        %v1461 = vsel %vm1445, %v1428, %v1347
        %v1462 = vmul.f32 %v1129, 0.75
        %v1463 = vmul.f32 %v1130, 0.75
        %v1464 = vmul.f32 %v1160, 0.75
        %v1465 = vmul.f32 %v1161, 0.75
        %v1466 = vmul.f32 %v1191, 0.75
        %v1467 = vmul.f32 %v1192, 0.75
        %v1468 = vmul.f32 %v1222, 0.75
        %v1469 = vmul.f32 %v1223, 0.75
        %v1470 = vmul.f32 %v1253, 0.75
        %v1471 = vmul.f32 %v1254, 0.75
        %v1472 = vmul.f32 %v1284, 0.75
        %v1473 = vmul.f32 %v1285, 0.75
        %v1474 = vmul.f32 %v1315, 0.75
        %v1475 = vmul.f32 %v1316, 0.75
        %v1476 = vmul.f32 %v1346, 0.75
        %v1477 = vmul.f32 %v1347, 0.75
        %v1478 = vmul.f32 %v1397, 0.25
        %v1479 = vmul.f32 %v1398, 0.25
        %v1480 = vmul.f32 %v1399, 0.25
        %v1481 = vmul.f32 %v1400, 0.25
        %v1482 = vmul.f32 %v1401, 0.25
        %v1483 = vmul.f32 %v1402, 0.25
        %v1484 = vmul.f32 %v1403, 0.25
        %v1485 = vmul.f32 %v1404, 0.25
        %v1486 = vmul.f32 %v1405, 0.25
        %v1487 = vmul.f32 %v1406, 0.25
        %v1488 = vmul.f32 %v1407, 0.25
        %v1489 = vmul.f32 %v1408, 0.25
        %v1490 = vmul.f32 %v1409, 0.25
        %v1491 = vmul.f32 %v1410, 0.25
        %v1492 = vmul.f32 %v1411, 0.25
        %v1493 = vmul.f32 %v1412, 0.25
        %v1494 = vadd.f32 %v1462, %v1478
        %v1495 = vadd.f32 %v1463, %v1479
        %v1496 = vadd.f32 %v1464, %v1480
        %v1497 = vadd.f32 %v1465, %v1481
        %v1498 = vadd.f32 %v1466, %v1482
        %v1499 = vadd.f32 %v1467, %v1483
        %v1500 = vadd.f32 %v1468, %v1484
        %v1501 = vadd.f32 %v1469, %v1485
        %v1502 = vadd.f32 %v1470, %v1486
        %v1503 = vadd.f32 %v1471, %v1487
        %v1504 = vadd.f32 %v1472, %v1488
        %v1505 = vadd.f32 %v1473, %v1489
        %v1506 = vadd.f32 %v1474, %v1490
        %v1507 = vadd.f32 %v1475, %v1491
        %v1508 = vadd.f32 %v1476, %v1492
        %v1509 = vadd.f32 %v1477, %v1493
        %1510 = vst [vmem:[%s271] sm:$0xff] %v1494
        %1511 = vst [vmem:[%s271 + $0x8] sm:$0xff] %v1495
        %1512 = vst [vmem:[%s271 + $0x20] sm:$0xff] %v1496
        %1513 = vst [vmem:[%s271 + $0x28] sm:$0xff] %v1497
        %1514 = vst [vmem:[%s271 + $0x40] sm:$0xff] %v1498
        %1515 = vst [vmem:[%s271 + $0x48] sm:$0xff] %v1499
        %1516 = vst [vmem:[%s271 + $0x60] sm:$0xff] %v1500
        %1517 = vst [vmem:[%s271 + $0x68] sm:$0xff] %v1501
        %1518 = vst [vmem:[%s271 + $0x80] sm:$0xff] %v1502
        %1519 = vst [vmem:[%s271 + $0x88] sm:$0xff] %v1503
        %1520 = vst [vmem:[%s271 + $0xa0] sm:$0xff] %v1504
        %1521 = vst [vmem:[%s271 + $0xa8] sm:$0xff] %v1505
        %1522 = vst [vmem:[%s271 + $0xc0] sm:$0xff] %v1506
        %1523 = vst [vmem:[%s271 + $0xc8] sm:$0xff] %v1507
        %1524 = vst [vmem:[%s271 + $0xe0] sm:$0xff] %v1508
        %1525 = vst [vmem:[%s271 + $0xe8] sm:$0xff] %v1509
        %v1526 = vmul.f32 %v1446, 0.25
        %v1527 = vmul.f32 %v1447, 0.25
        %v1528 = vmul.f32 %v1448, 0.25
        %v1529 = vmul.f32 %v1449, 0.25
        %v1530 = vmul.f32 %v1450, 0.25
        %v1531 = vmul.f32 %v1451, 0.25
        %v1532 = vmul.f32 %v1452, 0.25
        %v1533 = vmul.f32 %v1453, 0.25
        %v1534 = vmul.f32 %v1454, 0.25
        %v1535 = vmul.f32 %v1455, 0.25
        %v1536 = vmul.f32 %v1456, 0.25
        %v1537 = vmul.f32 %v1457, 0.25
        %v1538 = vmul.f32 %v1458, 0.25
        %v1539 = vmul.f32 %v1459, 0.25
        %v1540 = vmul.f32 %v1460, 0.25
        %v1541 = vmul.f32 %v1461, 0.25
        %v1542 = vadd.f32 %v1462, %v1526
        %v1543 = vadd.f32 %v1463, %v1527
        %v1544 = vadd.f32 %v1464, %v1528
        %v1545 = vadd.f32 %v1465, %v1529
        %v1546 = vadd.f32 %v1466, %v1530
        %v1547 = vadd.f32 %v1467, %v1531
        %v1548 = vadd.f32 %v1468, %v1532
        %v1549 = vadd.f32 %v1469, %v1533
        %v1550 = vadd.f32 %v1470, %v1534
        %v1551 = vadd.f32 %v1471, %v1535
        %v1552 = vadd.f32 %v1472, %v1536
        %v1553 = vadd.f32 %v1473, %v1537
        %v1554 = vadd.f32 %v1474, %v1538
        %v1555 = vadd.f32 %v1475, %v1539
        %v1556 = vadd.f32 %v1476, %v1540
        %v1557 = vadd.f32 %v1477, %v1541
        %1558 = vst [vmem:[%s271 + $0x10] sm:$0xff] %v1542
        %1559 = vst [vmem:[%s271 + $0x18] sm:$0xff] %v1543
        %1560 = vst [vmem:[%s271 + $0x30] sm:$0xff] %v1544
        %1561 = vst [vmem:[%s271 + $0x38] sm:$0xff] %v1545
        %1562 = vst [vmem:[%s271 + $0x50] sm:$0xff] %v1546
        %1563 = vst [vmem:[%s271 + $0x58] sm:$0xff] %v1547
        %1564 = vst [vmem:[%s271 + $0x70] sm:$0xff] %v1548
        %1565 = vst [vmem:[%s271 + $0x78] sm:$0xff] %v1549
        %1566 = vst [vmem:[%s271 + $0x90] sm:$0xff] %v1550
        %1567 = vst [vmem:[%s271 + $0x98] sm:$0xff] %v1551
        %1568 = vst [vmem:[%s271 + $0xb0] sm:$0xff] %v1552
        %1569 = vst [vmem:[%s271 + $0xb8] sm:$0xff] %v1553
        %1570 = vst [vmem:[%s271 + $0xd0] sm:$0xff] %v1554
        %1571 = vst [vmem:[%s271 + $0xd8] sm:$0xff] %v1555
        %1572 = vst [vmem:[%s271 + $0xf0] sm:$0xff] %v1556
        %1573 = vst [vmem:[%s271 + $0xf8] sm:$0xff] %v1557
        %s1574 = sand.u32 %s135, 1
        %s1575 = scalar_lea.sflag [#allocation4], %s1574
        %s1576 = sand.u32 %s135, 1
        %s1577 = smul.addr %s1576, 256
        %s1578 = scalar_lea.vmem [#allocation11], %s1577
        // Predicated region
        $region53: #{tpu_custom_call.1} parent=35 // pred_check
          %p1579 = pneg %p145
        $region54: #{tpu_custom_call.1} parent=35 // pred_check_branch
          %1581 = sbr.rel (%p1579) target = $region56
        $region55: #{tpu_custom_call.1} parent=35 // pred_region
          %s1582 = smul.u32 8, %s29
          %s1584 = ssub.s32 4096, 4096
          %1585 = vsyncadd %s1575, %s1584
          %s1586 = smul.addr %s1582, 4
          %s1587 = smul.addr %s28, 32
          %s1588 = sadd.s32 %s1586, %s1587
          %s1589 = smul.addr %s1588, 128
          %s1590 = scalar_lea.hbm %s4, %s1589
          %s1591 = sshll.u32 %s1578, 4
          %s1592 = int_to_ptr.vmem [resolvable:$true] %s1591
          %1597 = dma.vmem_to_hbm [thread:$0]  %s1592, 4096, %s1590, %s1575, 512, 512, 32
        $region56: #{tpu_custom_call.1} parent=35 // pred_fallthru
          _
      $region36: #{tpu_custom_call.1} parent=5 // pred_fallthru
        _
      %p1598 = scmp.le.s32.totalorder 2, %s19
      // Predicated region
      $region57: #{tpu_custom_call.1} parent=5 // pred_check
        %p1599 = pneg %p1598
      $region58: #{tpu_custom_call.1} parent=5 // pred_check_branch
        %1601 = sbr.rel (%p1599) target = $region60
      $region59: #{tpu_custom_call.1} parent=5 // pred_region
        %s1602 = ssub.s32 %s19, 2
        // Predicated region
        $region61: #{tpu_custom_call.1} parent=59 // pred_check
          %p1603 = pneg %p151
        $region62: #{tpu_custom_call.1} parent=59 // pred_check_branch
          %1605 = sbr.rel (%p1603) target = $region64
        $region63: #{tpu_custom_call.1} parent=59 // pred_region
          %s1606 = sand.u32 %s136, 1
          %s1607 = scalar_lea.sflag [#allocation4], %s1606
          %s1608 = sand.u32 %s136, 1
          %s1609 = smul.addr %s1608, 256
          %s1610 = scalar_lea.vmem [#allocation11], %s1609
          %1611 = dma.done %s1607, 4096
        $region64: #{tpu_custom_call.1} parent=59 // pred_fallthru
          _
      $region60: #{tpu_custom_call.1} parent=5 // pred_fallthru
        _
    $region6: #{tpu_custom_call.1} parent=1 // loop_footer
      %s23 = sadd.s32 1, %s19
    $region7: #{tpu_custom_call.1} parent=1 // loop_footer_branch
      %18 = sbr.rel target = $region3
    $region8: #{tpu_custom_call.1} parent=1 // loop_exit
      _
    %1612 = vsyncpa [#allocation3], 1
    %s1613 = scalar_lea.sflag [#allocation3], 1
    %1614 = vsyncpa %s1613, 1
    %1615 = vsyncpa [#allocation10], 1
    %1616 = vsyncpa [#allocation4], 1
    %s1617 = scalar_lea.sflag [#allocation4], 1
    %1618 = vsyncpa %s1617, 1
    %1619 = vsyncpa [#allocation5], 1
    %s1620 = scalar_lea.sflag [#allocation5], 1
    %1621 = vsyncpa %s1620, 1
    %1622 = vsyncpa [#allocation8], 1

</llo_original>
